<compile_context>
chip_gen: v6e
topology: v6e:2x2x1
jax: 0.10.0
libtpu: 0.0.40
codegen_flags: <defaults>
</compile_context>

<pallas_src>
import functools

import jax
import jax.numpy as jnp
from jax import lax
from jax.experimental import pallas as pl
from jax.experimental.pallas import tpu as pltpu


# --- Layout constants --------------------------------------------------------
K_PAD = 32        # im2col K (3*3*3 = 27) zero-padded for aligned MXU loads
CF_PAD = 128      # feature channels padded to one full lane width (real Cf = 32)
HEAD_PAD = 8      # head out-channels padded to one sublane group (real 4 / 2)
K_TILE = 128      # VRM reduction (HiWi) tile — innermost, "arbitrary" grid axis


# ------------------------------------------------------------------------------
# Fused Pallas kernel.  One grid step == (batch b, HiWi chunk k):
#   backbone matmul+ReLU on the chunk -> ivt 1x1+ReLU -> img head (stored)
#   and the chunk's contribution to the transposed VRM accumulator.
# On the last k step: VRM bias + ReLU + bev head + store.
# All matmuls run on the MXU in bf16 with f32 accumulation.
# ------------------------------------------------------------------------------
def _bev_lane_fused_kernel(p_ref, bbw_ref, bbb_ref, ivtw_ref, ivtb_ref,
                           vrm_ref, vrmb_ref, hbw_ref, hbb_ref,
                           hiw_ref, hib_ref,
                           bev_o_ref, img_o_ref, acc_ref):
    k = pl.program_id(1)

    @pl.when(k == 0)
    def _():
        acc_ref[...] = jnp.zeros_like(acc_ref)

    # ---- img_backbone: 3x3/s2 conv as matmul over this chunk's im2col rows ----
    feat = jnp.dot(p_ref[...], bbw_ref[...], preferred_element_type=jnp.float32)
    feat = jnp.maximum(feat + bbb_ref[...], 0.0)               # (K_TILE, CF_PAD) f32
    feat_bf = feat.astype(jnp.bfloat16)

    # ---- img_view_transformer, image branch: 1x1 conv + ReLU ----
    img_feat = jnp.dot(feat_bf, ivtw_ref[...], preferred_element_type=jnp.float32)
    img_feat = jnp.maximum(img_feat + ivtb_ref[...], 0.0)      # (K_TILE, CF_PAD)

    # ---- bev_lane_head, image head: channel-major output (HEAD_PAD, K_TILE) ----
    # out[o, r] = sum_c w^T[o, c] * img_feat[r, c]   ("NT" contraction, no transpose op)
    img_o = lax.dot_general(hiw_ref[...], img_feat.astype(jnp.bfloat16),
                            (((1,), (1,)), ((), ())),
                            preferred_element_type=jnp.float32) + hib_ref[...]
    img_o_ref[...] = img_o.astype(img_o_ref.dtype)

    # ---- img_view_transformer, VRM branch: transposed partial accumulate ----
    # acc[c, m] += sum_r feat[r, c] * vrm[r, m]      ("TN" contraction)
    acc_ref[...] += lax.dot_general(feat_bf, vrm_ref[...],
                                    (((0,), (0,)), ((), ())),
                                    preferred_element_type=jnp.float32)

    # ---- epilogue on the last reduction step: bias + ReLU + bev head + store ----
    @pl.when(k == pl.num_programs(1) - 1)
    def _():
        bev_feat = jnp.maximum(acc_ref[...] + vrmb_ref[...], 0.0)  # (CF_PAD, HbWb)
        bev_o = jnp.dot(hbw_ref[...], bev_feat.astype(jnp.bfloat16),
                        preferred_element_type=jnp.float32) + hbb_ref[...]
        bev_o_ref[...] = bev_o.astype(bev_o_ref.dtype)


def fused_pipeline(kp, patches_bf16, B, HiWi, HbWb):
    assert HiWi % K_TILE == 0, (HiWi, K_TILE)
    kt = HiWi // K_TILE

    def const(shape):
        return pl.BlockSpec(shape, lambda b, k: (0, 0))

    # Advisory cost hint for XLA's scheduler (VRM matmul dominates flops).
    flops = 2 * B * (HiWi * K_PAD * CF_PAD          # backbone
                     + HiWi * CF_PAD * CF_PAD       # ivt 1x1
                     + HiWi * CF_PAD * HEAD_PAD     # img head
                     + HiWi * CF_PAD * HbWb         # VRM
                     + HbWb * CF_PAD * HEAD_PAD)    # bev head
    bytes_accessed = (patches_bf16.size * 2
                      + sum(int(v.size) * v.dtype.itemsize for v in kp.values())
                      + B * HEAD_PAD * (HbWb + HiWi) * 4)

    bev_slab, img_slab = pl.pallas_call(
        _bev_lane_fused_kernel,
        out_shape=(jax.ShapeDtypeStruct((B * HEAD_PAD, HbWb), jnp.float32),
                   jax.ShapeDtypeStruct((B * HEAD_PAD, HiWi), jnp.float32)),
        grid=(B, kt),
        in_specs=[
            # im2col patches: one (K_TILE, K_PAD) chunk of batch b per step
            pl.BlockSpec((K_TILE, K_PAD), lambda b, k: (b * kt + k, 0)),
            const((K_PAD, CF_PAD)), const((1, CF_PAD)),       # backbone conv (padded)
            const((CF_PAD, CF_PAD)), const((1, CF_PAD)),      # ivt 1x1 conv
            # VRM weight tile: rows [k*K_TILE, (k+1)*K_TILE) of (HiWi, HbWb)
            pl.BlockSpec((K_TILE, HbWb), lambda b, k: (k, 0)),
            const((1, HbWb)),                                  # VRM bias (lane-dense row)
            const((HEAD_PAD, CF_PAD)), const((HEAD_PAD, 1)),   # bev head (transposed)
            const((HEAD_PAD, CF_PAD)), const((HEAD_PAD, 1)),   # img head (transposed)
        ],
        out_specs=(
            # bev slab: resident across the k reduction, written at k==last
            pl.BlockSpec((HEAD_PAD, HbWb), lambda b, k: (b, 0)),
            # img slab: one (HEAD_PAD, K_TILE) column block per (b, k)
            pl.BlockSpec((HEAD_PAD, K_TILE), lambda b, k: (b, k)),
        ),
        scratch_shapes=[pltpu.VMEM((CF_PAD, HbWb), jnp.float32)],  # VRM accumulator
        compiler_params=pltpu.CompilerParams(
            dimension_semantics=("parallel", "arbitrary"),   # batch over TCs on v7x
            vmem_limit_bytes=48 * 1024 * 1024),               # budgeted for 64 MiB v7x
        cost_estimate=pl.CostEstimate(flops=flops, transcendentals=0,
                                      bytes_accessed=bytes_accessed),
    )(patches_bf16,
      kp["bb_w"], kp["bb_b"],
      kp["ivt_img_w"], kp["ivt_img_b"],
      kp["vrm_w"], kp["vrm_b"],
      kp["head_bev_wt"], kp["head_bev_b"],
      kp["head_img_wt"], kp["head_img_b"])
    return bev_slab, img_slab


# ------------------------------------------------------------------------------
# Glue: im2col for the 3x3 stride-2 backbone conv (pure reshaping/slicing).
# ------------------------------------------------------------------------------
def im2col_nhwc(x_nhwc, kh, kw, stride, pad):
    x = jnp.pad(x_nhwc, ((0, 0), (pad, pad), (pad, pad), (0, 0)))
    B, Hp, Wp, C = x.shape
    Ho = (Hp - kh) // stride + 1
    Wo = (Wp - kw) // stride + 1
    cols = []
    for i in range(kh):
        for j in range(kw):
            cols.append(
                x[:, i:i + Ho * stride:stride, j:j + Wo * stride:stride, :])
    patches = jnp.concatenate(cols, axis=-1)          # (B, Ho, Wo, kh*kw*C)
    return patches.reshape(B * Ho * Wo, kh * kw * C), Ho, Wo


# ------------------------------------------------------------------------------
# Parameters (deterministic synthetic init; no checkpoint loading).
# ------------------------------------------------------------------------------
def init_raw_params(key, c_in=3, c_feat=32, hi=16, wi=16, hb=16, wb=16,
                    c_bev_out=4, c_img_out=2):
    ks = jax.random.split(key, 10)
    s = 0.05
    return {
        "bb_w": jax.random.normal(ks[0], (3 * 3 * c_in, c_feat), jnp.float32) * s,
        "bb_b": jax.random.normal(ks[1], (c_feat,), jnp.float32) * s,
        "vrm_w": jax.random.normal(ks[2], (hi * wi, hb * wb), jnp.float32) * s,
        "vrm_b": jax.random.normal(ks[3], (hb * wb,), jnp.float32) * s,
        "ivt_img_w": jax.random.normal(ks[4], (c_feat, c_feat), jnp.float32) * s,
        "ivt_img_b": jax.random.normal(ks[5], (c_feat,), jnp.float32) * s,
        "head_bev_w": jax.random.normal(ks[6], (c_feat, c_bev_out), jnp.float32) * s,
        "head_bev_b": jax.random.normal(ks[7], (c_bev_out,), jnp.float32) * s,
        "head_img_w": jax.random.normal(ks[8], (c_feat, c_img_out), jnp.float32) * s,
        "head_img_b": jax.random.normal(ks[9], (c_img_out,), jnp.float32) * s,
    }


def prepare_kernel_params(raw):
    """Pad / transpose / bf16-cast once so the kernel sees MXU-friendly layouts."""
    K, Cf = raw["bb_w"].shape
    HiWi, HbWb = raw["vrm_w"].shape
    nb = raw["head_bev_w"].shape[1]
    ni = raw["head_img_w"].shape[1]

    def pad2(x, rows, cols):
        return jnp.pad(x, ((0, rows - x.shape[0]), (0, cols - x.shape[1])))

    return {
        # backbone conv as matmul: K 27->32, Cf 32->128 (zero lanes are exact zeros)
        "bb_w": pad2(raw["bb_w"], K_PAD, CF_PAD).astype(jnp.bfloat16),
        "bb_b": jnp.pad(raw["bb_b"], (0, CF_PAD - Cf)).reshape(1, CF_PAD).astype(jnp.float32),
        # ivt 1x1 conv, lane-dense 128x128
        "ivt_img_w": pad2(raw["ivt_img_w"], CF_PAD, CF_PAD).astype(jnp.bfloat16),
        "ivt_img_b": jnp.pad(raw["ivt_img_b"], (0, CF_PAD - Cf)).reshape(1, CF_PAD).astype(jnp.float32),
        # VRM in natural (HiWi, HbWb) orientation (kernel does the TN contraction);
        # bias stored as a lane-dense (1, HbWb) row -> no (HbWb, 1) lane-pad inflation.
        "vrm_w": raw["vrm_w"].astype(jnp.bfloat16),
        "vrm_b": raw["vrm_b"].reshape(1, HbWb).astype(jnp.float32),
        # heads pre-transposed to (out_ch_pad=8, CF_PAD): channel-major (NCHW) outputs
        # with only 2x/4x sublane write amplification, lanes stay dense.
        "head_bev_wt": pad2(raw["head_bev_w"].T, HEAD_PAD, CF_PAD).astype(jnp.bfloat16),
        "head_bev_b": jnp.pad(raw["head_bev_b"], (0, HEAD_PAD - nb)).reshape(HEAD_PAD, 1).astype(jnp.float32),
        "head_img_wt": pad2(raw["head_img_w"].T, HEAD_PAD, CF_PAD).astype(jnp.bfloat16),
        "head_img_b": jnp.pad(raw["head_img_b"], (0, HEAD_PAD - ni)).reshape(HEAD_PAD, 1).astype(jnp.float32),
    }


# ------------------------------------------------------------------------------
# Forward pass mirroring BEVLaneTraced.forward:
#   x = img_backbone(image); bev_feat, img_feat = img_view_transformer(x)
#   bev_out, img_out = bev_lane_head(bev_feat, img_feat); return bev_out, img_out
# ------------------------------------------------------------------------------
def bev_lane_traced_forward(kparams, image_nchw, *, hb=16, wb=16,
                            c_bev_out=4, c_img_out=2):
    B = image_nchw.shape[0]
    x_nhwc = jnp.transpose(image_nchw, (0, 2, 3, 1))          # NCHW -> NHWC
    patches, Ho, Wo = im2col_nhwc(x_nhwc, 3, 3, stride=2, pad=1)
    K = patches.shape[1]
    patches = jnp.pad(patches, ((0, 0), (0, K_PAD - K))).astype(jnp.bfloat16)

    HiWi, HbWb = Ho * Wo, hb * wb
    bev_slab, img_slab = fused_pipeline(kparams, patches, B, HiWi, HbWb)

    # Slabs are channel-major, i.e. already NCHW after reshape; just drop the
    # sublane-padded extra channels. No final transposes needed.
    bev_out = bev_slab.reshape(B, HEAD_PAD, hb, wb)[:, :c_bev_out]
    img_out = img_slab.reshape(B, HEAD_PAD, Ho, Wo)[:, :c_img_out]
    return bev_out, img_out


# ------------------------------------------------------------------------------
# Pure-JAX f32 reference (same math as the original PyTorch pipeline layout).
# ------------------------------------------------------------------------------
def reference_forward(raw, image_nchw, *, hb=16, wb=16):
    B = image_nchw.shape[0]
    x_nhwc = jnp.transpose(image_nchw, (0, 2, 3, 1))
    patches, Ho, Wo = im2col_nhwc(x_nhwc, 3, 3, 2, 1)
    Cf = raw["bb_w"].shape[1]
    feat = jax.nn.relu(patches @ raw["bb_w"] + raw["bb_b"])
    feat_nhwc = feat.reshape(B, Ho, Wo, Cf)

    img_feat = jax.nn.relu(feat_nhwc.reshape(-1, Cf) @ raw["ivt_img_w"]
                           + raw["ivt_img_b"])
    feat_bc_hw = jnp.transpose(feat_nhwc, (0, 3, 1, 2)).reshape(B * Cf, Ho * Wo)
    bev_rows = jax.nn.relu(feat_bc_hw @ raw["vrm_w"] + raw["vrm_b"])
    bev_feat_nhwc = jnp.transpose(bev_rows.reshape(B, Cf, hb, wb), (0, 2, 3, 1))

    bev_out = bev_feat_nhwc.reshape(-1, Cf) @ raw["head_bev_w"] + raw["head_bev_b"]
    img_out = img_feat @ raw["head_img_w"] + raw["head_img_b"]
    Cb = raw["head_bev_w"].shape[1]
    Ci = raw["head_img_w"].shape[1]
    bev_out = jnp.transpose(bev_out.reshape(B, hb, wb, Cb), (0, 3, 1, 2))
    img_out = jnp.transpose(img_out.reshape(B, Ho, Wo, Ci), (0, 3, 1, 2))
    return bev_out, img_out


if __name__ == "__main__":
    key = jax.random.PRNGKey(0)
    k_img, k_par = jax.random.split(key)

    # Small deterministic inputs: image (B=2, Cin=3, H=32, W=32), NCHW.
    # Backbone /2 -> 16x16 image grid (HiWi=256 = 2 K-tiles); BEV grid 16x16.
    image = jax.random.normal(k_img, (2, 3, 32, 32), jnp.float32)
    raw = init_raw_params(k_par, c_in=3, c_feat=32, hi=16, wi=16, hb=16, wb=16)
    kparams = prepare_kernel_params(raw)

    fwd = jax.jit(functools.partial(bev_lane_traced_forward, hb=16, wb=16))
    bev_out, img_out = fwd(kparams, image)
    jax.block_until_ready((bev_out, img_out))

    assert bev_out.shape == (2, 4, 16, 16), bev_out.shape
    assert img_out.shape == (2, 2, 16, 16), img_out.shape
    assert bev_out.dtype == jnp.float32 and img_out.dtype == jnp.float32

    # Correctness vs. f32 reference (loose tolerance: MXU operands are bf16).
    bev_ref, img_ref = reference_forward(raw, image, hb=16, wb=16)
    bev_err = float(jnp.max(jnp.abs(bev_out - bev_ref)))
    img_err = float(jnp.max(jnp.abs(img_out - img_ref)))
    assert bev_err < 2e-2, f"bev max abs err {bev_err}"
    assert img_err < 2e-2, f"img max abs err {img_err}"

    print("KERNEL_OK")
</pallas_src>

<mosaic_0001>
module attributes {stable_mosaic.version = 11 : i64} {
  func.func @_bev_lane_fused_kernel(%arg0: i32, %arg1: i32, %arg2: memref<128x32xbf16, #tpu.memory_space<vmem>>, %arg3: memref<32x128xbf16, #tpu.memory_space<vmem>>, %arg4: memref<1x128xf32, #tpu.memory_space<vmem>>, %arg5: memref<128x128xbf16, #tpu.memory_space<vmem>>, %arg6: memref<1x128xf32, #tpu.memory_space<vmem>>, %arg7: memref<128x256xbf16, #tpu.memory_space<vmem>>, %arg8: memref<1x256xf32, #tpu.memory_space<vmem>>, %arg9: memref<8x128xbf16, #tpu.memory_space<vmem>>, %arg10: memref<8x1xf32, #tpu.memory_space<vmem>>, %arg11: memref<8x128xbf16, #tpu.memory_space<vmem>>, %arg12: memref<8x1xf32, #tpu.memory_space<vmem>>, %arg13: memref<8x256xf32, #tpu.memory_space<vmem>>, %arg14: memref<8x128xf32, #tpu.memory_space<vmem>>, %arg15: memref<128x256xf32, #tpu.memory_space<vmem>>) attributes {dimension_semantics = [#tpu.dimension_semantics<parallel>, #tpu.dimension_semantics<arbitrary>], iteration_bounds = array<i64: 2, 2>, scalar_prefetch = 0 : i64, scratch_operands = 1 : i64, tpu.core_type = #tpu.core_type<tc>, window_params = [{transform_indices = @transform_0, window_bounds = array<i64: 128, 32>}, {pipeline_mode = #tpu.pipeline_mode<synchronous>, transform_indices = @transform_1, window_bounds = array<i64: 32, 128>}, {pipeline_mode = #tpu.pipeline_mode<synchronous>, transform_indices = @transform_2, window_bounds = array<i64: 1, 128>}, {pipeline_mode = #tpu.pipeline_mode<synchronous>, transform_indices = @transform_3, window_bounds = array<i64: 128, 128>}, {pipeline_mode = #tpu.pipeline_mode<synchronous>, transform_indices = @transform_4, window_bounds = array<i64: 1, 128>}, {transform_indices = @transform_5, window_bounds = array<i64: 128, 256>}, {pipeline_mode = #tpu.pipeline_mode<synchronous>, transform_indices = @transform_6, window_bounds = array<i64: 1, 256>}, {pipeline_mode = #tpu.pipeline_mode<synchronous>, transform_indices = @transform_7, window_bounds = array<i64: 8, 128>}, {pipeline_mode = #tpu.pipeline_mode<synchronous>, transform_indices = @transform_8, window_bounds = array<i64: 8, 1>}, {pipeline_mode = #tpu.pipeline_mode<synchronous>, transform_indices = @transform_9, window_bounds = array<i64: 8, 128>}, {pipeline_mode = #tpu.pipeline_mode<synchronous>, transform_indices = @transform_10, window_bounds = array<i64: 8, 1>}, {transform_indices = @transform_11, window_bounds = array<i64: 8, 256>}, {transform_indices = @transform_12, window_bounds = array<i64: 8, 128>}]} {
    %c0_i32 = arith.constant 0 : i32
    %0 = arith.cmpi eq, %arg1, %c0_i32 : i32
    %1 = arith.extui %0 : i1 to i32
    %c0_i32_0 = arith.constant 0 : i32
    %2 = arith.cmpi ne, %1, %c0_i32_0 : i32
    scf.if %2 {
      %cst_28 = arith.constant 0.000000e+00 : f32
      %34 = vector.broadcast %cst_28 : f32 to vector<128x256xf32>
      %c0_29 = arith.constant 0 : index
      %c0_30 = arith.constant 0 : index
      %35 = vector.load %arg15[%c0_29, %c0_30] : memref<128x256xf32, #tpu.memory_space<vmem>>, vector<128x256xf32>
      tpu.vector_store %arg15[%c0_29, %c0_30], %34 {strides = array<i32>} : memref<128x256xf32, #tpu.memory_space<vmem>>, vector<128x256xf32>,
    } else {
    }
    %c0 = arith.constant 0 : index
    %c0_1 = arith.constant 0 : index
    %3 = vector.load %arg2[%c0, %c0_1] : memref<128x32xbf16, #tpu.memory_space<vmem>>, vector<128x32xbf16>
    %c0_2 = arith.constant 0 : index
    %c0_3 = arith.constant 0 : index
    %4 = vector.load %arg3[%c0_2, %c0_3] : memref<32x128xbf16, #tpu.memory_space<vmem>>, vector<32x128xbf16>
    %cst = arith.constant dense<0.000000e+00> : vector<128x128xf32>
    %5 = tpu.matmul %3, %4, %cst {dimension_numbers = #tpu.dot_dimension_numbers<[1], [0], [0], [1], [0, 0, 1, 1], [], []>} : vector<128x32xbf16>, vector<32x128xbf16>, vector<128x128xf32> -> vector<128x128xf32>
    %c0_4 = arith.constant 0 : index
    %c0_5 = arith.constant 0 : index
    %6 = vector.load %arg4[%c0_4, %c0_5] : memref<1x128xf32, #tpu.memory_space<vmem>>, vector<1x128xf32>
    %7 = vector.broadcast %6 : vector<1x128xf32> to vector<128x128xf32>
    %8 = arith.addf %5, %7 : vector<128x128xf32>
    %cst_6 = arith.constant 0.000000e+00 : f32
    %9 = vector.broadcast %cst_6 : f32 to vector<128x128xf32>
    %10 = arith.maximumf %8, %9 : vector<128x128xf32>
    %11 = arith.truncf %10 : vector<128x128xf32> to vector<128x128xbf16>
    %c0_7 = arith.constant 0 : index
    %c0_8 = arith.constant 0 : index
    %12 = vector.load %arg5[%c0_7, %c0_8] : memref<128x128xbf16, #tpu.memory_space<vmem>>, vector<128x128xbf16>
    %cst_9 = arith.constant dense<0.000000e+00> : vector<128x128xf32>
    %13 = tpu.matmul %11, %12, %cst_9 {dimension_numbers = #tpu.dot_dimension_numbers<[1], [0], [0], [1], [0, 0, 1, 1], [], []>} : vector<128x128xbf16>, vector<128x128xbf16>, vector<128x128xf32> -> vector<128x128xf32>
    %c0_10 = arith.constant 0 : index
    %c0_11 = arith.constant 0 : index
    %14 = vector.load %arg6[%c0_10, %c0_11] : memref<1x128xf32, #tpu.memory_space<vmem>>, vector<1x128xf32>
    %15 = vector.broadcast %14 : vector<1x128xf32> to vector<128x128xf32>
    %16 = arith.addf %13, %15 : vector<128x128xf32>
    %cst_12 = arith.constant 0.000000e+00 : f32
    %17 = vector.broadcast %cst_12 : f32 to vector<128x128xf32>
    %18 = arith.maximumf %16, %17 : vector<128x128xf32>
    %c0_13 = arith.constant 0 : index
    %c0_14 = arith.constant 0 : index
    %19 = vector.load %arg11[%c0_13, %c0_14] : memref<8x128xbf16, #tpu.memory_space<vmem>>, vector<8x128xbf16>
    %20 = arith.truncf %18 : vector<128x128xf32> to vector<128x128xbf16>
    %cst_15 = arith.constant dense<0.000000e+00> : vector<8x128xf32>
    %21 = tpu.matmul %19, %20, %cst_15 {dimension_numbers = #tpu.dot_dimension_numbers<[1], [1], [0], [0], [0, 0, 1, 0], [], []>} : vector<8x128xbf16>, vector<128x128xbf16>, vector<8x128xf32> -> vector<8x128xf32>
    %c0_16 = arith.constant 0 : index
    %c0_17 = arith.constant 0 : index
    %22 = vector.load %arg12[%c0_16, %c0_17] : memref<8x1xf32, #tpu.memory_space<vmem>>, vector<8x1xf32>
    %23 = vector.broadcast %22 : vector<8x1xf32> to vector<8x128xf32>
    %24 = arith.addf %21, %23 : vector<8x128xf32>
    %c0_18 = arith.constant 0 : index
    %c0_19 = arith.constant 0 : index
    %25 = vector.load %arg14[%c0_18, %c0_19] : memref<8x128xf32, #tpu.memory_space<vmem>>, vector<8x128xf32>
    tpu.vector_store %arg14[%c0_18, %c0_19], %24 {strides = array<i32>} : memref<8x128xf32, #tpu.memory_space<vmem>>, vector<8x128xf32>,
    %c0_20 = arith.constant 0 : index
    %c0_21 = arith.constant 0 : index
    %26 = vector.load %arg15[%c0_20, %c0_21] : memref<128x256xf32, #tpu.memory_space<vmem>>, vector<128x256xf32>
    %c0_22 = arith.constant 0 : index
    %c0_23 = arith.constant 0 : index
    %27 = vector.load %arg7[%c0_22, %c0_23] : memref<128x256xbf16, #tpu.memory_space<vmem>>, vector<128x256xbf16>
    %cst_24 = arith.constant dense<0.000000e+00> : vector<128x256xf32>
    %28 = tpu.matmul %11, %27, %cst_24 {dimension_numbers = #tpu.dot_dimension_numbers<[0], [0], [1], [1], [0, 1, 1, 1], [], []>} : vector<128x128xbf16>, vector<128x256xbf16>, vector<128x256xf32> -> vector<128x256xf32>
    %29 = arith.addf %26, %28 : vector<128x256xf32>
    %c0_25 = arith.constant 0 : index
    %c0_26 = arith.constant 0 : index
    %30 = vector.load %arg15[%c0_25, %c0_26] : memref<128x256xf32, #tpu.memory_space<vmem>>, vector<128x256xf32>
    tpu.vector_store %arg15[%c0_25, %c0_26], %29 {strides = array<i32>} : memref<128x256xf32, #tpu.memory_space<vmem>>, vector<128x256xf32>,
    %c1_i32 = arith.constant 1 : i32
    %31 = arith.cmpi eq, %arg1, %c1_i32 : i32
    %32 = arith.extui %31 : i1 to i32
    %c0_i32_27 = arith.constant 0 : i32
    %33 = arith.cmpi ne, %32, %c0_i32_27 : i32
    scf.if %33 {
      %c0_28 = arith.constant 0 : index
      %c0_29 = arith.constant 0 : index
      %34 = vector.load %arg15[%c0_28, %c0_29] : memref<128x256xf32, #tpu.memory_space<vmem>>, vector<128x256xf32>
      %c0_30 = arith.constant 0 : index
      %c0_31 = arith.constant 0 : index
      %35 = vector.load %arg8[%c0_30, %c0_31] : memref<1x256xf32, #tpu.memory_space<vmem>>, vector<1x256xf32>
      %36 = vector.broadcast %35 : vector<1x256xf32> to vector<128x256xf32>
      %37 = arith.addf %34, %36 : vector<128x256xf32>
      %cst_32 = arith.constant 0.000000e+00 : f32
      %38 = vector.broadcast %cst_32 : f32 to vector<128x256xf32>
      %39 = arith.maximumf %37, %38 : vector<128x256xf32>
      %c0_33 = arith.constant 0 : index
      %c0_34 = arith.constant 0 : index
      %40 = vector.load %arg9[%c0_33, %c0_34] : memref<8x128xbf16, #tpu.memory_space<vmem>>, vector<8x128xbf16>
      %41 = arith.truncf %39 : vector<128x256xf32> to vector<128x256xbf16>
      %cst_35 = arith.constant dense<0.000000e+00> : vector<8x256xf32>
      %42 = tpu.matmul %40, %41, %cst_35 {dimension_numbers = #tpu.dot_dimension_numbers<[1], [0], [0], [1], [0, 0, 1, 1], [], []>} : vector<8x128xbf16>, vector<128x256xbf16>, vector<8x256xf32> -> vector<8x256xf32>
      %c0_36 = arith.constant 0 : index
      %c0_37 = arith.constant 0 : index
      %43 = vector.load %arg10[%c0_36, %c0_37] : memref<8x1xf32, #tpu.memory_space<vmem>>, vector<8x1xf32>
      %44 = vector.broadcast %43 : vector<8x1xf32> to vector<8x256xf32>
      %45 = arith.addf %42, %44 : vector<8x256xf32>
      %c0_38 = arith.constant 0 : index
      %c0_39 = arith.constant 0 : index
      %46 = vector.load %arg13[%c0_38, %c0_39] : memref<8x256xf32, #tpu.memory_space<vmem>>, vector<8x256xf32>
      tpu.vector_store %arg13[%c0_38, %c0_39], %45 {strides = array<i32>} : memref<8x256xf32, #tpu.memory_space<vmem>>, vector<8x256xf32>,
    } else {
    }
    return
  }
  func.func @transform_0(%arg0: i32, %arg1: i32) -> (i32, i32) {
    %c2_i32 = arith.constant 2 : i32
    %0 = arith.muli %arg0, %c2_i32 : i32
    %1 = arith.addi %0, %arg1 : i32
    %c0_i32 = arith.constant 0 : i32
    %c0_i32_0 = arith.constant 0 : i32
    return %1, %c0_i32 : i32, i32
  }
  func.func @transform_1(%arg0: i32, %arg1: i32) -> (i32, i32) {
    %c0_i32 = arith.constant 0 : i32
    %c0_i32_0 = arith.constant 0 : i32
    %c0_i32_1 = arith.constant 0 : i32
    return %c0_i32, %c0_i32_0 : i32, i32
  }
  func.func @transform_2(%arg0: i32, %arg1: i32) -> (i32, i32) {
    %c0_i32 = arith.constant 0 : i32
    %c0_i32_0 = arith.constant 0 : i32
    %c0_i32_1 = arith.constant 0 : i32
    return %c0_i32, %c0_i32_0 : i32, i32
  }
  func.func @transform_3(%arg0: i32, %arg1: i32) -> (i32, i32) {
    %c0_i32 = arith.constant 0 : i32
    %c0_i32_0 = arith.constant 0 : i32
    %c0_i32_1 = arith.constant 0 : i32
    return %c0_i32, %c0_i32_0 : i32, i32
  }
  func.func @transform_4(%arg0: i32, %arg1: i32) -> (i32, i32) {
    %c0_i32 = arith.constant 0 : i32
    %c0_i32_0 = arith.constant 0 : i32
    %c0_i32_1 = arith.constant 0 : i32
    return %c0_i32, %c0_i32_0 : i32, i32
  }
  func.func @transform_5(%arg0: i32, %arg1: i32) -> (i32, i32) {
    %c0_i32 = arith.constant 0 : i32
    %c0_i32_0 = arith.constant 0 : i32
    return %arg1, %c0_i32 : i32, i32
  }
  func.func @transform_6(%arg0: i32, %arg1: i32) -> (i32, i32) {
    %c0_i32 = arith.constant 0 : i32
    %c0_i32_0 = arith.constant 0 : i32
    %c0_i32_1 = arith.constant 0 : i32
    return %c0_i32, %c0_i32_0 : i32, i32
  }
  func.func @transform_7(%arg0: i32, %arg1: i32) -> (i32, i32) {
    %c0_i32 = arith.constant 0 : i32
    %c0_i32_0 = arith.constant 0 : i32
    %c0_i32_1 = arith.constant 0 : i32
    return %c0_i32, %c0_i32_0 : i32, i32
  }
  func.func @transform_8(%arg0: i32, %arg1: i32) -> (i32, i32) {
    %c0_i32 = arith.constant 0 : i32
    %c0_i32_0 = arith.constant 0 : i32
    %c0_i32_1 = arith.constant 0 : i32
    return %c0_i32, %c0_i32_0 : i32, i32
  }
  func.func @transform_9(%arg0: i32, %arg1: i32) -> (i32, i32) {
    %c0_i32 = arith.constant 0 : i32
    %c0_i32_0 = arith.constant 0 : i32
    %c0_i32_1 = arith.constant 0 : i32
    return %c0_i32, %c0_i32_0 : i32, i32
  }
  func.func @transform_10(%arg0: i32, %arg1: i32) -> (i32, i32) {
    %c0_i32 = arith.constant 0 : i32
    %c0_i32_0 = arith.constant 0 : i32
    %c0_i32_1 = arith.constant 0 : i32
    return %c0_i32, %c0_i32_0 : i32, i32
  }
  func.func @transform_11(%arg0: i32, %arg1: i32) -> (i32, i32) {
    %c0_i32 = arith.constant 0 : i32
    %c0_i32_0 = arith.constant 0 : i32
    return %arg0, %c0_i32 : i32, i32
  }
  func.func @transform_12(%arg0: i32, %arg1: i32) -> (i32, i32) {
    %c0_i32 = arith.constant 0 : i32
    return %arg0, %arg1 : i32, i32
  }
}

</mosaic_0001>

<llo_original>
// kernel: bev_lane_traced_forward.1
$region0: #{bev_lane_traced_forward.1}
  #allocation0 [shape = 'u32[]', space=smem, size = 0x4, offset = 0x4, fixed_abs, tag = 'smem constant byte address 0x4 - core index']
  #allocation1 [shape = 'u32[144,128]{1,0:T(1,128)}', space=vmem, size = 0x12000, scoped, tag = 'internal scratch']
  #allocation2 [shape = 'f32[128,256]{1,0:T(8,128)}', space=vmem, size = 0x20000, scoped, tag = 'scratch operand']
  %s0 = inlined_call_operand.vmem [shape: bf16[512,32], index: 0, kind: input, shape index: {}]
  %s1 = inlined_call_operand.vmem [shape: bf16[32,128], index: 1, kind: input, shape index: {}]
  %s2 = inlined_call_operand.vmem [shape: f32[1,128], index: 2, kind: input, shape index: {}]
  %s3 = inlined_call_operand.vmem [shape: bf16[128,128], index: 3, kind: input, shape index: {}]
  %s4 = inlined_call_operand.vmem [shape: f32[1,128], index: 4, kind: input, shape index: {}]
  %s5 = inlined_call_operand.vmem [shape: bf16[256,256], index: 5, kind: input, shape index: {}]
  %s6 = inlined_call_operand.vmem [shape: f32[1,256], index: 6, kind: input, shape index: {}]
  %s7 = inlined_call_operand.vmem [shape: bf16[8,128], index: 7, kind: input, shape index: {}]
  %s8 = inlined_call_operand.vmem [shape: f32[8,1], index: 8, kind: input, shape index: {}]
  %s9 = inlined_call_operand.vmem [shape: bf16[8,128], index: 9, kind: input, shape index: {}]
  %s10 = inlined_call_operand.vmem [shape: f32[8,1], index: 10, kind: input, shape index: {}]
  %s11 = inlined_call_operand.vmem [shape: f32[16,256], index: 11, kind: output, shape index: {0}]
  %s12 = inlined_call_operand.vmem [shape: f32[16,256], index: 12, kind: output, shape index: {1}]
  %13 = xla_tuple %s11, %s12
  %s14 = sld [smem:[#allocation0]]
  $region93: #{bev_lane_traced_forward.1} parent=0
    _
  %s16 = ssub.s32 1, %s14
  %s17 = scalar_select 0, %s16, %s14
  loop: start=0, step=1, limit=6
  $region2: #{bev_lane_traced_forward.1} parent=0 // loop_pre_header
    _
  $region3: #{bev_lane_traced_forward.1} parent=0 // loop_header
    %s19 = sphi 0, %s23
    %p20 = scmp.ge.s32.totalorder %s19, 6
    %s26 = sphi 0, %s38
    %s27 = sphi 0, %s34
    %s28 = sphi 0, %s26
    %s29 = sphi 0, %s27
    %s30 = sphi 0, %s28
    %s31 = sphi 0, %s29
    %s45 = sphi 0, %s47
    %s48 = sphi 0, %s45
    %s49 = sphi 0, %s48
    %s65 = sphi 0, %s49
    %s69 = sphi 0, %s69
    %s71 = sphi 0, %s69
    %s72 = sphi 0, %s71
    %s86 = sphi 0, %s72
    %s90 = sphi 0, %s90
    %s92 = sphi 0, %s90
    %s93 = sphi 0, %s92
    %s107 = sphi 0, %s93
    %s111 = sphi 0, %s111
    %s113 = sphi 0, %s111
    %s114 = sphi 0, %s113
    %s128 = sphi 0, %s114
    %s132 = sphi 0, %s132
    %s134 = sphi 0, %s132
    %s135 = sphi 0, %s134
    %s149 = sphi 0, %s135
    %s155 = sphi 0, %s157
    %s158 = sphi 0, %s155
    %s159 = sphi 0, %s158
    %s175 = sphi 0, %s159
    %s179 = sphi 0, %s179
    %s181 = sphi 0, %s179
    %s182 = sphi 0, %s181
    %s196 = sphi 0, %s182
    %s200 = sphi 0, %s200
    %s202 = sphi 0, %s200
    %s203 = sphi 0, %s202
    %s217 = sphi 0, %s203
    %s221 = sphi 0, %s221
    %s223 = sphi 0, %s221
    %s224 = sphi 0, %s223
    %s238 = sphi 0, %s224
    %s242 = sphi 0, %s242
    %s244 = sphi 0, %s242
    %s245 = sphi 0, %s244
    %s259 = sphi 0, %s245
    %s263 = sphi 0, %s263
    %s265 = sphi 0, %s263
    %s266 = sphi 0, %s265
    %s280 = sphi 0, %s266
    %s286 = sphi 0, %s288
    %s289 = sphi 0, %s286
    %s290 = sphi 0, %s289
    %s306 = sphi 0, %s290
    %s314 = sphi 0, %s316
    %s317 = sphi 0, %s314
    %s318 = sphi 0, %s317
    %s334 = sphi 0, %s318
  $region4: #{bev_lane_traced_forward.1} parent=0 // loop_header_branch
    %22 = sbr.rel (%p20) target = $region8
  $region5: #{bev_lane_traced_forward.1} parent=0 // loop_body
    %s24 = ssub.s32 %s19, 1
    %s25 = ssub.s32 %s19, 2
    %s32 = sadd.s32 1, %s27
    %p33 = scmp.ge.s32.totalorder %s32, 2
    %s34 = scalar_select %p33, 0, %s32
    %s35 = sadd.s32 1, %s26
    %s36 = scalar_select %p33, %s35, %s26
    %p37 = scmp.ge.s32.totalorder %s36, 2
    %s38 = scalar_select %p37, 0, %s36
    %s39 = smul.u32 %s26, 2
    %s40 = sadd.s32 %s39, %s27
    %s41 = smul.u32 %s38, 2
    %s42 = sadd.s32 %s41, %s34
    %s43 = ssub.s32 %s40, %s42
    %p44 = scmp.eq.s32.totalorder %s43, 0
    %s46 = sadd.s32 %s45, 1
    %s47 = scalar_select %p44, %s45, %s46
    %p50 = pneg %p44
    %p51 = scmp.eq.s32.totalorder %s19, 3
    %p52 = por %p50, %p51
    %p53 = scmp.ne.s32.totalorder %s45, %s48
    %p54 = scmp.eq.s32.totalorder %s19, 0
    %p55 = por %p53, %p54
    %p56 = scmp.ne.s32.totalorder %s45, %s48
    %p57 = scmp.eq.s32.totalorder %s24, 3
    %p58 = por %p56, %p57
    %p59 = scmp.ne.s32.totalorder %s48, %s49
    %p60 = scmp.eq.s32.totalorder %s24, 0
    %p61 = por %p59, %p60
    %p62 = scmp.ne.s32.totalorder %s48, %s49
    %p63 = scmp.eq.s32.totalorder %s25, 3
    %p64 = por %p62, %p63
    %p66 = scmp.ne.s32.totalorder %s49, %s65
    %p67 = scmp.eq.s32.totalorder %s25, 0
    %p68 = por %p66, %p67
    %s70 = sadd.s32 %s69, 1
    %p73 = scmp.eq.s32.totalorder %s19, 3
    %p74 = scmp.ne.s32.totalorder %s69, %s71
    %p75 = scmp.eq.s32.totalorder %s19, 0
    %p76 = por %p74, %p75
    %p77 = scmp.ne.s32.totalorder %s69, %s71
    %p78 = scmp.eq.s32.totalorder %s24, 3
    %p79 = por %p77, %p78
    %p80 = scmp.ne.s32.totalorder %s71, %s72
    %p81 = scmp.eq.s32.totalorder %s24, 0
    %p82 = por %p80, %p81
    %p83 = scmp.ne.s32.totalorder %s71, %s72
    %p84 = scmp.eq.s32.totalorder %s25, 3
    %p85 = por %p83, %p84
    %p87 = scmp.ne.s32.totalorder %s72, %s86
    %p88 = scmp.eq.s32.totalorder %s25, 0
    %p89 = por %p87, %p88
    %s91 = sadd.s32 %s90, 1
    %p94 = scmp.eq.s32.totalorder %s19, 3
    %p95 = scmp.ne.s32.totalorder %s90, %s92
    %p96 = scmp.eq.s32.totalorder %s19, 0
    %p97 = por %p95, %p96
    %p98 = scmp.ne.s32.totalorder %s90, %s92
    %p99 = scmp.eq.s32.totalorder %s24, 3
    %p100 = por %p98, %p99
    %p101 = scmp.ne.s32.totalorder %s92, %s93
    %p102 = scmp.eq.s32.totalorder %s24, 0
    %p103 = por %p101, %p102
    %p104 = scmp.ne.s32.totalorder %s92, %s93
    %p105 = scmp.eq.s32.totalorder %s25, 3
    %p106 = por %p104, %p105
    %p108 = scmp.ne.s32.totalorder %s93, %s107
    %p109 = scmp.eq.s32.totalorder %s25, 0
    %p110 = por %p108, %p109
    %s112 = sadd.s32 %s111, 1
    %p115 = scmp.eq.s32.totalorder %s19, 3
    %p116 = scmp.ne.s32.totalorder %s111, %s113
    %p117 = scmp.eq.s32.totalorder %s19, 0
    %p118 = por %p116, %p117
    %p119 = scmp.ne.s32.totalorder %s111, %s113
    %p120 = scmp.eq.s32.totalorder %s24, 3
    %p121 = por %p119, %p120
    %p122 = scmp.ne.s32.totalorder %s113, %s114
    %p123 = scmp.eq.s32.totalorder %s24, 0
    %p124 = por %p122, %p123
    %p125 = scmp.ne.s32.totalorder %s113, %s114
    %p126 = scmp.eq.s32.totalorder %s25, 3
    %p127 = por %p125, %p126
    %p129 = scmp.ne.s32.totalorder %s114, %s128
    %p130 = scmp.eq.s32.totalorder %s25, 0
    %p131 = por %p129, %p130
    %s133 = sadd.s32 %s132, 1
    %p136 = scmp.eq.s32.totalorder %s19, 3
    %p137 = scmp.ne.s32.totalorder %s132, %s134
    %p138 = scmp.eq.s32.totalorder %s19, 0
    %p139 = por %p137, %p138
    %p140 = scmp.ne.s32.totalorder %s132, %s134
    %p141 = scmp.eq.s32.totalorder %s24, 3
    %p142 = por %p140, %p141
    %p143 = scmp.ne.s32.totalorder %s134, %s135
    %p144 = scmp.eq.s32.totalorder %s24, 0
    %p145 = por %p143, %p144
    %p146 = scmp.ne.s32.totalorder %s134, %s135
    %p147 = scmp.eq.s32.totalorder %s25, 3
    %p148 = por %p146, %p147
    %p150 = scmp.ne.s32.totalorder %s135, %s149
    %p151 = scmp.eq.s32.totalorder %s25, 0
    %p152 = por %p150, %p151
    %s153 = ssub.s32 %s27, %s34
    %p154 = scmp.eq.s32.totalorder %s153, 0
    %s156 = sadd.s32 %s155, 1
    %s157 = scalar_select %p154, %s155, %s156
    %p160 = pneg %p154
    %p161 = scmp.eq.s32.totalorder %s19, 3
    %p162 = por %p160, %p161
    %p163 = scmp.ne.s32.totalorder %s155, %s158
    %p164 = scmp.eq.s32.totalorder %s19, 0
    %p165 = por %p163, %p164
    %p166 = scmp.ne.s32.totalorder %s155, %s158
    %p167 = scmp.eq.s32.totalorder %s24, 3
    %p168 = por %p166, %p167
    %p169 = scmp.ne.s32.totalorder %s158, %s159
    %p170 = scmp.eq.s32.totalorder %s24, 0
    %p171 = por %p169, %p170
    %p172 = scmp.ne.s32.totalorder %s158, %s159
    %p173 = scmp.eq.s32.totalorder %s25, 3
    %p174 = por %p172, %p173
    %p176 = scmp.ne.s32.totalorder %s159, %s175
    %p177 = scmp.eq.s32.totalorder %s25, 0
    %p178 = por %p176, %p177
    %s180 = sadd.s32 %s179, 1
    %p183 = scmp.eq.s32.totalorder %s19, 3
    %p184 = scmp.ne.s32.totalorder %s179, %s181
    %p185 = scmp.eq.s32.totalorder %s19, 0
    %p186 = por %p184, %p185
    %p187 = scmp.ne.s32.totalorder %s179, %s181
    %p188 = scmp.eq.s32.totalorder %s24, 3
    %p189 = por %p187, %p188
    %p190 = scmp.ne.s32.totalorder %s181, %s182
    %p191 = scmp.eq.s32.totalorder %s24, 0
    %p192 = por %p190, %p191
    %p193 = scmp.ne.s32.totalorder %s181, %s182
    %p194 = scmp.eq.s32.totalorder %s25, 3
    %p195 = por %p193, %p194
    %p197 = scmp.ne.s32.totalorder %s182, %s196
    %p198 = scmp.eq.s32.totalorder %s25, 0
    %p199 = por %p197, %p198
    %s201 = sadd.s32 %s200, 1
    %p204 = scmp.eq.s32.totalorder %s19, 3
    %p205 = scmp.ne.s32.totalorder %s200, %s202
    %p206 = scmp.eq.s32.totalorder %s19, 0
    %p207 = por %p205, %p206
    %p208 = scmp.ne.s32.totalorder %s200, %s202
    %p209 = scmp.eq.s32.totalorder %s24, 3
    %p210 = por %p208, %p209
    %p211 = scmp.ne.s32.totalorder %s202, %s203
    %p212 = scmp.eq.s32.totalorder %s24, 0
    %p213 = por %p211, %p212
    %p214 = scmp.ne.s32.totalorder %s202, %s203
    %p215 = scmp.eq.s32.totalorder %s25, 3
    %p216 = por %p214, %p215
    %p218 = scmp.ne.s32.totalorder %s203, %s217
    %p219 = scmp.eq.s32.totalorder %s25, 0
    %p220 = por %p218, %p219
    %s222 = sadd.s32 %s221, 1
    %p225 = scmp.eq.s32.totalorder %s19, 3
    %p226 = scmp.ne.s32.totalorder %s221, %s223
    %p227 = scmp.eq.s32.totalorder %s19, 0
    %p228 = por %p226, %p227
    %p229 = scmp.ne.s32.totalorder %s221, %s223
    %p230 = scmp.eq.s32.totalorder %s24, 3
    %p231 = por %p229, %p230
    %p232 = scmp.ne.s32.totalorder %s223, %s224
    %p233 = scmp.eq.s32.totalorder %s24, 0
    %p234 = por %p232, %p233
    %p235 = scmp.ne.s32.totalorder %s223, %s224
    %p236 = scmp.eq.s32.totalorder %s25, 3
    %p237 = por %p235, %p236
    %p239 = scmp.ne.s32.totalorder %s224, %s238
    %p240 = scmp.eq.s32.totalorder %s25, 0
    %p241 = por %p239, %p240
    %s243 = sadd.s32 %s242, 1
    %p246 = scmp.eq.s32.totalorder %s19, 3
    %p247 = scmp.ne.s32.totalorder %s242, %s244
    %p248 = scmp.eq.s32.totalorder %s19, 0
    %p249 = por %p247, %p248
    %p250 = scmp.ne.s32.totalorder %s242, %s244
    %p251 = scmp.eq.s32.totalorder %s24, 3
    %p252 = por %p250, %p251
    %p253 = scmp.ne.s32.totalorder %s244, %s245
    %p254 = scmp.eq.s32.totalorder %s24, 0
    %p255 = por %p253, %p254
    %p256 = scmp.ne.s32.totalorder %s244, %s245
    %p257 = scmp.eq.s32.totalorder %s25, 3
    %p258 = por %p256, %p257
    %p260 = scmp.ne.s32.totalorder %s245, %s259
    %p261 = scmp.eq.s32.totalorder %s25, 0
    %p262 = por %p260, %p261
    %s264 = sadd.s32 %s263, 1
    %p267 = scmp.eq.s32.totalorder %s19, 3
    %p268 = scmp.ne.s32.totalorder %s263, %s265
    %p269 = scmp.eq.s32.totalorder %s19, 0
    %p270 = por %p268, %p269
    %p271 = scmp.ne.s32.totalorder %s263, %s265
    %p272 = scmp.eq.s32.totalorder %s24, 3
    %p273 = por %p271, %p272
    %p274 = scmp.ne.s32.totalorder %s265, %s266
    %p275 = scmp.eq.s32.totalorder %s24, 0
    %p276 = por %p274, %p275
    %p277 = scmp.ne.s32.totalorder %s265, %s266
    %p278 = scmp.eq.s32.totalorder %s25, 3
    %p279 = por %p277, %p278
    %p281 = scmp.ne.s32.totalorder %s266, %s280
    %p282 = scmp.eq.s32.totalorder %s25, 0
    %p283 = por %p281, %p282
    %s284 = ssub.s32 %s26, %s38
    %p285 = scmp.eq.s32.totalorder %s284, 0
    %s287 = sadd.s32 %s286, 1
    %s288 = scalar_select %p285, %s286, %s287
    %p291 = pneg %p285
    %p292 = scmp.eq.s32.totalorder %s19, 3
    %p293 = por %p291, %p292
    %p294 = scmp.ne.s32.totalorder %s286, %s289
    %p295 = scmp.eq.s32.totalorder %s19, 0
    %p296 = por %p294, %p295
    %p297 = scmp.ne.s32.totalorder %s286, %s289
    %p298 = scmp.eq.s32.totalorder %s24, 3
    %p299 = por %p297, %p298
    %p300 = scmp.ne.s32.totalorder %s289, %s290
    %p301 = scmp.eq.s32.totalorder %s24, 0
    %p302 = por %p300, %p301
    %p303 = scmp.ne.s32.totalorder %s289, %s290
    %p304 = scmp.eq.s32.totalorder %s25, 3
    %p305 = por %p303, %p304
    %p307 = scmp.ne.s32.totalorder %s290, %s306
    %p308 = scmp.eq.s32.totalorder %s25, 0
    %p309 = por %p307, %p308
    %s310 = ssub.s32 %s26, %s38
    %s311 = ssub.s32 %s27, %s34
    %s312 = sor.u32 %s310, %s311
    %p313 = scmp.eq.s32.totalorder %s312, 0
    %s315 = sadd.s32 %s314, 1
    %s316 = scalar_select %p313, %s314, %s315
    %p319 = pneg %p313
    %p320 = scmp.eq.s32.totalorder %s19, 3
    %p321 = por %p319, %p320
    %p322 = scmp.ne.s32.totalorder %s314, %s317
    %p323 = scmp.eq.s32.totalorder %s19, 0
    %p324 = por %p322, %p323
    %p325 = scmp.ne.s32.totalorder %s314, %s317
    %p326 = scmp.eq.s32.totalorder %s24, 3
    %p327 = por %p325, %p326
    %p328 = scmp.ne.s32.totalorder %s317, %s318
    %p329 = scmp.eq.s32.totalorder %s24, 0
    %p330 = por %p328, %p329
    %p331 = scmp.ne.s32.totalorder %s317, %s318
    %p332 = scmp.eq.s32.totalorder %s25, 3
    %p333 = por %p331, %p332
    %p335 = scmp.ne.s32.totalorder %s318, %s334
    %p336 = scmp.eq.s32.totalorder %s25, 0
    %p337 = por %p335, %p336
    %p338 = scmp.le.s32.totalorder 1, %s19
    %p339 = scmp.lt.s32.totalorder %s19, 5
    %p340 = pnand %p338, %p339
    %p341 = pneg %p340
    // Predicated region
    $region9: #{bev_lane_traced_forward.1} parent=5 // pred_check
      _
    $region10: #{bev_lane_traced_forward.1} parent=5 // pred_check_branch
      %343 = sbr.rel (%p340) target = $region12
    $region11: #{bev_lane_traced_forward.1} parent=5 // pred_region
      %s344 = ssub.s32 %s19, 1
      // Predicated region
      $region13: #{bev_lane_traced_forward.1} parent=11 // pred_check
        %p345 = pneg %p82
      $region14: #{bev_lane_traced_forward.1} parent=11 // pred_check_branch
        %347 = sbr.rel (%p345) target = $region16
      $region15: #{bev_lane_traced_forward.1} parent=11 // pred_region
        _
      $region16: #{bev_lane_traced_forward.1} parent=11 // pred_fallthru
        _
      // Predicated region
      $region17: #{bev_lane_traced_forward.1} parent=11 // pred_check
        %p348 = pneg %p103
      $region18: #{bev_lane_traced_forward.1} parent=11 // pred_check_branch
        %350 = sbr.rel (%p348) target = $region20
      $region19: #{bev_lane_traced_forward.1} parent=11 // pred_region
        _
      $region20: #{bev_lane_traced_forward.1} parent=11 // pred_fallthru
        _
      // Predicated region
      $region21: #{bev_lane_traced_forward.1} parent=11 // pred_check
        %p351 = pneg %p124
      $region22: #{bev_lane_traced_forward.1} parent=11 // pred_check_branch
        %353 = sbr.rel (%p351) target = $region24
      $region23: #{bev_lane_traced_forward.1} parent=11 // pred_region
        _
      $region24: #{bev_lane_traced_forward.1} parent=11 // pred_fallthru
        _
      // Predicated region
      $region25: #{bev_lane_traced_forward.1} parent=11 // pred_check
        %p354 = pneg %p145
      $region26: #{bev_lane_traced_forward.1} parent=11 // pred_check_branch
        %356 = sbr.rel (%p354) target = $region28
      $region27: #{bev_lane_traced_forward.1} parent=11 // pred_region
        _
      $region28: #{bev_lane_traced_forward.1} parent=11 // pred_fallthru
        _
      // Predicated region
      $region29: #{bev_lane_traced_forward.1} parent=11 // pred_check
        %p357 = pneg %p192
      $region30: #{bev_lane_traced_forward.1} parent=11 // pred_check_branch
        %359 = sbr.rel (%p357) target = $region32
      $region31: #{bev_lane_traced_forward.1} parent=11 // pred_region
        _
      $region32: #{bev_lane_traced_forward.1} parent=11 // pred_fallthru
        _
      // Predicated region
      $region33: #{bev_lane_traced_forward.1} parent=11 // pred_check
        %p360 = pneg %p213
      $region34: #{bev_lane_traced_forward.1} parent=11 // pred_check_branch
        %362 = sbr.rel (%p360) target = $region36
      $region35: #{bev_lane_traced_forward.1} parent=11 // pred_region
        _
      $region36: #{bev_lane_traced_forward.1} parent=11 // pred_fallthru
        _
      // Predicated region
      $region37: #{bev_lane_traced_forward.1} parent=11 // pred_check
        %p363 = pneg %p234
      $region38: #{bev_lane_traced_forward.1} parent=11 // pred_check_branch
        %365 = sbr.rel (%p363) target = $region40
      $region39: #{bev_lane_traced_forward.1} parent=11 // pred_region
        _
      $region40: #{bev_lane_traced_forward.1} parent=11 // pred_fallthru
        _
      // Predicated region
      $region41: #{bev_lane_traced_forward.1} parent=11 // pred_check
        %p366 = pneg %p255
      $region42: #{bev_lane_traced_forward.1} parent=11 // pred_check_branch
        %368 = sbr.rel (%p366) target = $region44
      $region43: #{bev_lane_traced_forward.1} parent=11 // pred_region
        _
      $region44: #{bev_lane_traced_forward.1} parent=11 // pred_fallthru
        _
      // Predicated region
      $region45: #{bev_lane_traced_forward.1} parent=11 // pred_check
        %p369 = pneg %p276
      $region46: #{bev_lane_traced_forward.1} parent=11 // pred_check_branch
        %371 = sbr.rel (%p369) target = $region48
      $region47: #{bev_lane_traced_forward.1} parent=11 // pred_region
        _
      $region48: #{bev_lane_traced_forward.1} parent=11 // pred_fallthru
        _
    $region12: #{bev_lane_traced_forward.1} parent=5 // pred_fallthru
      _
    %p372 = scmp.lt.s32.totalorder %s19, 4
    // Predicated region
    $region49: #{bev_lane_traced_forward.1} parent=5 // pred_check
      %p373 = pneg %p372
    $region50: #{bev_lane_traced_forward.1} parent=5 // pred_check_branch
      %375 = sbr.rel (%p373) target = $region52
    $region51: #{bev_lane_traced_forward.1} parent=5 // pred_region
      // Predicated region
      $region53: #{bev_lane_traced_forward.1} parent=51 // pred_check
        %p376 = pneg %p55
      $region54: #{bev_lane_traced_forward.1} parent=51 // pred_check_branch
        %378 = sbr.rel (%p376) target = $region56
      $region55: #{bev_lane_traced_forward.1} parent=51 // pred_region
        %s379 = smul.u32 %s26, 2
        %s380 = sadd.s32 %s379, %s27
        %s381 = smul.u32 16, %s380
        %p382 = scmp.lt.s32.totalorder %s381, 63
        %s383 = scalar_select %p382, %s381, 63
        %s384 = smul.addr %s383, 4
        %s385 = scalar_lea.vmem %s0, %s384
        %s386 = smul.u32 %s26, 2
        %s387 = sadd.s32 %s386, %s27
        %s388 = smul.u32 16, %s387
      $region56: #{bev_lane_traced_forward.1} parent=51 // pred_fallthru
        _
      // Predicated region
      $region57: #{bev_lane_traced_forward.1} parent=51 // pred_check
        %p389 = pneg %p165
      $region58: #{bev_lane_traced_forward.1} parent=51 // pred_check_branch
        %391 = sbr.rel (%p389) target = $region60
      $region59: #{bev_lane_traced_forward.1} parent=51 // pred_region
        %s392 = smul.u32 16, %s27
        %p393 = scmp.lt.s32.totalorder %s392, 31
        %s394 = scalar_select %p393, %s392, 31
        %s395 = smul.addr %s394, 2
        %s396 = smul.addr %s395, 4
        %s397 = scalar_lea.vmem %s5, %s396
        %s398 = smul.u32 16, %s27
      $region60: #{bev_lane_traced_forward.1} parent=51 // pred_fallthru
        _
    $region52: #{bev_lane_traced_forward.1} parent=5 // pred_fallthru
      _
    %p399 = scmp.le.s32.totalorder 1, %s19
    %p400 = scmp.lt.s32.totalorder %s19, 5
    %p401 = pnand %p399, %p400
    %p402 = pneg %p401
    // Predicated region
    $region61: #{bev_lane_traced_forward.1} parent=5 // pred_check
      _
    $region62: #{bev_lane_traced_forward.1} parent=5 // pred_check_branch
      %404 = sbr.rel (%p401) target = $region64
    $region63: #{bev_lane_traced_forward.1} parent=5 // pred_region
      %s405 = ssub.s32 %s19, 1
      %s406 = smul.u32 %s28, 2
      %s407 = sadd.s32 %s406, %s29
      %s408 = smul.u32 16, %s407
      %p409 = scmp.lt.s32.totalorder %s408, 63
      %s410 = scalar_select %p409, %s408, 63
      %s411 = smul.addr %s410, 4
      %s412 = scalar_lea.vmem %s0, %s411
      %p413 = pneg %p61
      %p414 = pneg %p58
      %p415 = pneg %p82
      %p416 = pneg %p79
      %p417 = pneg %p103
      %p418 = pneg %p100
      %p419 = pneg %p124
      %p420 = pneg %p121
      %p421 = pneg %p145
      %p422 = pneg %p142
      %s423 = smul.u32 16, %s29
      %p424 = scmp.lt.s32.totalorder %s423, 31
      %s425 = scalar_select %p424, %s423, 31
      %s426 = smul.addr %s425, 2
      %s427 = smul.addr %s426, 4
      %s428 = scalar_lea.vmem %s5, %s427
      %p429 = pneg %p171
      %p430 = pneg %p168
      %p431 = pneg %p192
      %p432 = pneg %p189
      %p433 = pneg %p213
      %p434 = pneg %p210
      %p435 = pneg %p234
      %p436 = pneg %p231
      %p437 = pneg %p255
      %p438 = pneg %p252
      %p439 = pneg %p276
      %p440 = pneg %p273
      %p441 = pneg %p302
      %p442 = pneg %p299
      %p443 = scmp.lt.s32.totalorder %s28, 1
      %s444 = scalar_select %p443, %s28, 1
      %s445 = smul.addr %s444, 2
      %s446 = smul.addr %s445, 8
      %s447 = scalar_lea.vmem %s11, %s446
      %p448 = pneg %p330
      %p449 = pneg %p327
      %p450 = scmp.lt.s32.totalorder %s28, 1
      %s451 = scalar_select %p450, %s28, 1
      %p452 = scmp.lt.s32.totalorder %s29, 1
      %s453 = scalar_select %p452, %s29, 1
      %s454 = smul.addr %s451, 2
      %s455 = sadd.s32 %s453, %s454
      %s456 = smul.addr %s455, 8
      %s457 = scalar_lea.vmem %s12, %s456
      %s458 = smul.u32 %s28, 2
      %s459 = sadd.s32 %s458, %s29
      %s460 = smul.u32 16, %s459
      %p461 = scmp.lt.s32.totalorder %s460, 63
      %s462 = scalar_select %p461, %s460, 63
      %s463 = smul.addr %s462, 4
      %s464 = scalar_lea.vmem %s0, %s463
      %s465 = smul.u32 %s28, 2
      %s466 = sadd.s32 %s465, %s29
      %s467 = smul.u32 16, %s466
      %s468 = smul.u32 16, %s29
      %p469 = scmp.lt.s32.totalorder %s468, 31
      %s470 = scalar_select %p469, %s468, 31
      %s471 = smul.addr %s470, 2
      %s472 = smul.addr %s471, 4
      %s473 = scalar_lea.vmem %s5, %s472
      %s474 = smul.u32 16, %s29
      %p475 = scmp.lt.s32.totalorder %s28, 1
      %s476 = scalar_select %p475, %s28, 1
      %s477 = smul.addr %s476, 2
      %s478 = smul.addr %s477, 8
      %s479 = scalar_lea.vmem %s11, %s478
      %p480 = scmp.lt.s32.totalorder %s28, 1
      %s481 = scalar_select %p480, %s28, 1
      %p482 = scmp.lt.s32.totalorder %s29, 1
      %s483 = scalar_select %p482, %s29, 1
      %s484 = smul.addr %s481, 2
      %s485 = sadd.s32 %s483, %s484
      %s486 = smul.addr %s485, 8
      %s487 = scalar_lea.vmem %s12, %s486
      %p489 = scmp.eq.s32.totalorder %s29, 0
      // Predicated region
      $region65: #{bev_lane_traced_forward.1} parent=63 // pred_check
        %p490 = pneg %p489
      $region66: #{bev_lane_traced_forward.1} parent=63 // pred_check_branch
        %492 = sbr.rel (%p490) target = $region68
      $region67: #{bev_lane_traced_forward.1} parent=63 // pred_region
        %493 = vst [vmem:[#allocation2] sm:$0xff] 0.0
        %494 = vst [vmem:[#allocation2 + $0x8] sm:$0xff] 0.0
        %495 = vst [vmem:[#allocation2 + $0x10] sm:$0xff] 0.0
        %496 = vst [vmem:[#allocation2 + $0x18] sm:$0xff] 0.0
        %497 = vst [vmem:[#allocation2 + $0x20] sm:$0xff] 0.0
        %498 = vst [vmem:[#allocation2 + $0x28] sm:$0xff] 0.0
        %499 = vst [vmem:[#allocation2 + $0x30] sm:$0xff] 0.0
        %500 = vst [vmem:[#allocation2 + $0x38] sm:$0xff] 0.0
        %501 = vst [vmem:[#allocation2 + $0x40] sm:$0xff] 0.0
        %502 = vst [vmem:[#allocation2 + $0x48] sm:$0xff] 0.0
        %503 = vst [vmem:[#allocation2 + $0x50] sm:$0xff] 0.0
        %504 = vst [vmem:[#allocation2 + $0x58] sm:$0xff] 0.0
        %505 = vst [vmem:[#allocation2 + $0x60] sm:$0xff] 0.0
        %506 = vst [vmem:[#allocation2 + $0x68] sm:$0xff] 0.0
        %507 = vst [vmem:[#allocation2 + $0x70] sm:$0xff] 0.0
        %508 = vst [vmem:[#allocation2 + $0x78] sm:$0xff] 0.0
        %509 = vst [vmem:[#allocation2 + $0x80] sm:$0xff] 0.0
        %510 = vst [vmem:[#allocation2 + $0x88] sm:$0xff] 0.0
        %511 = vst [vmem:[#allocation2 + $0x90] sm:$0xff] 0.0
        %512 = vst [vmem:[#allocation2 + $0x98] sm:$0xff] 0.0
        %513 = vst [vmem:[#allocation2 + $0xa0] sm:$0xff] 0.0
        %514 = vst [vmem:[#allocation2 + $0xa8] sm:$0xff] 0.0
        %515 = vst [vmem:[#allocation2 + $0xb0] sm:$0xff] 0.0
        %516 = vst [vmem:[#allocation2 + $0xb8] sm:$0xff] 0.0
        %517 = vst [vmem:[#allocation2 + $0xc0] sm:$0xff] 0.0
        %518 = vst [vmem:[#allocation2 + $0xc8] sm:$0xff] 0.0
        %519 = vst [vmem:[#allocation2 + $0xd0] sm:$0xff] 0.0
        %520 = vst [vmem:[#allocation2 + $0xd8] sm:$0xff] 0.0
        %521 = vst [vmem:[#allocation2 + $0xe0] sm:$0xff] 0.0
        %522 = vst [vmem:[#allocation2 + $0xe8] sm:$0xff] 0.0
        %523 = vst [vmem:[#allocation2 + $0xf0] sm:$0xff] 0.0
        %524 = vst [vmem:[#allocation2 + $0xf8] sm:$0xff] 0.0
      $region68: #{bev_lane_traced_forward.1} parent=63 // pred_fallthru
        _
      %v525 = vld [vmem:[%s464] sm:$0xf]
      %v526 = vld [vmem:[%s464 + $0x4] sm:$0xf]
      %v527 = vld [vmem:[%s464 + $0x8] sm:$0xf]
      %v528 = vld [vmem:[%s464 + $0xc] sm:$0xf]
      %v529 = vld [vmem:[%s464 + $0x10] sm:$0xf]
      %v530 = vld [vmem:[%s464 + $0x14] sm:$0xf]
      %v531 = vld [vmem:[%s464 + $0x18] sm:$0xf]
      %v532 = vld [vmem:[%s464 + $0x1c] sm:$0xf]
      %v533 = vld [vmem:[%s464 + $0x20] sm:$0xf]
      %v534 = vld [vmem:[%s464 + $0x24] sm:$0xf]
      %v535 = vld [vmem:[%s464 + $0x28] sm:$0xf]
      %v536 = vld [vmem:[%s464 + $0x2c] sm:$0xf]
      %v537 = vld [vmem:[%s464 + $0x30] sm:$0xf]
      %v538 = vld [vmem:[%s464 + $0x34] sm:$0xf]
      %v539 = vld [vmem:[%s464 + $0x38] sm:$0xf]
      %v540 = vld [vmem:[%s464 + $0x3c] sm:$0xf]
      %v541 = vld [vmem:[%s1] sm:$0xf]
      %v542 = vld [vmem:[%s1 + $0x4] sm:$0xf]
      %v543 = vld [vmem:[%s1 + $0x8] sm:$0xf]
      %v544 = vld [vmem:[%s1 + $0xc] sm:$0xf]
      %v545 = vld [vmem:[%s2] sm:$0x1]
      %v547 = vlaneseq
      %v548 = vshrl.u32 %v547, 7
      %v549 = vsub.s32 0, %v548
      %v550 = vrot.slane %v545, %v549
      %v568 = vunpack.c.l.b16 %v525
      %v569 = vunpack.c.l.b16 %v526
      %v570 = vunpack.c.l.b16 %v527
      %v571 = vunpack.c.l.b16 %v528
      %v572 = vunpack.c.l.b16 %v529
      %v573 = vunpack.c.l.b16 %v530
      %v574 = vunpack.c.l.b16 %v531
      %v575 = vunpack.c.l.b16 %v532
      %v576 = vunpack.c.l.b16 %v533
      %v577 = vunpack.c.l.b16 %v534
      %v578 = vunpack.c.l.b16 %v535
      %v579 = vunpack.c.l.b16 %v536
      %v580 = vunpack.c.l.b16 %v537
      %v581 = vunpack.c.l.b16 %v538
      %v582 = vunpack.c.l.b16 %v539
      %v583 = vunpack.c.l.b16 %v540
      %v584 = vpack.c.b16 %v569, %v568
      %v585 = vpack.c.b16 %v571, %v570
      %v586 = vpack.c.b16 %v573, %v572
      %v587 = vpack.c.b16 %v575, %v574
      %v588 = vpack.c.b16 %v577, %v576
      %v589 = vpack.c.b16 %v579, %v578
      %v590 = vpack.c.b16 %v581, %v580
      %v591 = vpack.c.b16 %v583, %v582
      %v596 = vunpack.c.l.b16 %v541
      %v597 = vunpack.c.l.b16 %v542
      %v598 = vunpack.c.l.b16 %v543
      %v599 = vunpack.c.l.b16 %v544
      %v600 = vpack.c.b16 %v597, %v596
      %v601 = vpack.c.b16 %v599, %v598
      %vm604 = vcmask 261120
      %v606 = vsel %vm604, %v584, 0
      %v609 = vsel %vm604, %v585, 0
      %v612 = vsel %vm604, %v586, 0
      %v615 = vsel %vm604, %v587, 0
      %v618 = vsel %vm604, %v588, 0
      %v621 = vsel %vm604, %v589, 0
      %v624 = vsel %vm604, %v590, 0
      %v627 = vsel %vm604, %v591, 0
      %629 = vmatprep.subr.bf16.mxu0 0
      %630 = vmatpush1.bf16.msra.mxu0 0
      %631 = vmatprep.subr.bf16.mxu0 0
      %632 = vmatpush1.bf16.msra.mxu0 0
      %633 = vmatprep.subr.bf16.mxu0 0
      %634 = vmatpush1.bf16.msra.mxu0 0
      %635 = vmatprep.subr.bf16.mxu0 0
      %636 = vmatpush1.bf16.msra.mxu0 0
      %637 = vmatprep.subr.bf16.mxu0 0
      %638 = vmatpush1.bf16.msra.mxu0 0
      %639 = vmatprep.subr.bf16.mxu0 0
      %640 = vmatpush1.bf16.msra.mxu0 0
      %641 = vmatprep.subr.bf16.mxu0 0
      %642 = vmatpush1.bf16.msra.mxu0 %v601
      %643 = vmatprep.subr.bf16.mxu0 0
      %644 = vmatpush1.bf16.msra.mxu0 %v600
      %645 = vmatprep.subr.bf16.mxu0 0
      %646 = vmatpush2.bf16.msra.mxu0 0
      %647 = vmatprep.subr.bf16.mxu0 0
      %648 = vmatpush2.bf16.msra.mxu0 0
      %649 = vmatprep.subr.bf16.mxu0 0
      %650 = vmatpush2.bf16.msra.mxu0 0
      %651 = vmatprep.subr.bf16.mxu0 0
      %652 = vmatpush2.bf16.msra.mxu0 0
      %653 = vmatprep.subr.bf16.mxu0 0
      %654 = vmatpush2.bf16.msra.mxu0 0
      %655 = vmatprep.subr.bf16.mxu0 0
      %656 = vmatpush2.bf16.msra.mxu0 0
      %657 = vmatprep.subr.bf16.mxu0 0
      %658 = vmatpush2.bf16.msra.mxu0 0
      %659 = vmatprep.subr.bf16.mxu0 0
      %660 = vmatpush2.bf16.msra.mxu0 0
      %661 = vmatprep.mubr.bf16.mxu0 0
      %662 = vmatmul.mubr.bf16.gmra.mxu0 %v606
      %v663 = vpop.f32.mrf.mxu0
      %v664 = vadd.f32 %v550, %v663
      %v665 = vpop.f32.mrf.mxu0
      %v666 = vpop.f32.mrf.mxu0
      %v667 = vadd.f32 %v550, %v666
      %v668 = vpop.f32.mrf.mxu0
      %669 = vmatprep.mubr.bf16.mxu0 0
      %670 = vmatmul.mubr.bf16.gmra.mxu0 %v609
      %v671 = vpop.f32.mrf.mxu0
      %v672 = vadd.f32 %v550, %v671
      %v673 = vpop.f32.mrf.mxu0
      %v674 = vpop.f32.mrf.mxu0
      %v675 = vadd.f32 %v550, %v674
      %v676 = vpop.f32.mrf.mxu0
      %677 = vmatprep.mubr.bf16.mxu0 0
      %678 = vmatmul.mubr.bf16.gmra.mxu0 %v612
      %v679 = vpop.f32.mrf.mxu0
      %v680 = vadd.f32 %v550, %v679
      %v681 = vpop.f32.mrf.mxu0
      %v682 = vpop.f32.mrf.mxu0
      %v683 = vadd.f32 %v550, %v682
      %v684 = vpop.f32.mrf.mxu0
      %685 = vmatprep.mubr.bf16.mxu0 0
      %686 = vmatmul.mubr.bf16.gmra.mxu0 %v615
      %v687 = vpop.f32.mrf.mxu0
      %v688 = vadd.f32 %v550, %v687
      %v689 = vpop.f32.mrf.mxu0
      %v690 = vpop.f32.mrf.mxu0
      %v691 = vadd.f32 %v550, %v690
      %v692 = vpop.f32.mrf.mxu0
      %693 = vmatprep.mubr.bf16.mxu0 0
      %694 = vmatmul.mubr.bf16.gmra.mxu0 %v618
      %v695 = vpop.f32.mrf.mxu0
      %v696 = vadd.f32 %v550, %v695
      %v697 = vpop.f32.mrf.mxu0
      %v698 = vpop.f32.mrf.mxu0
      %v699 = vadd.f32 %v550, %v698
      %v700 = vpop.f32.mrf.mxu0
      %701 = vmatprep.mubr.bf16.mxu0 0
      %702 = vmatmul.mubr.bf16.gmra.mxu0 %v621
      %v703 = vpop.f32.mrf.mxu0
      %v704 = vadd.f32 %v550, %v703
      %v705 = vpop.f32.mrf.mxu0
      %v706 = vpop.f32.mrf.mxu0
      %v707 = vadd.f32 %v550, %v706
      %v708 = vpop.f32.mrf.mxu0
      %709 = vmatprep.mubr.bf16.mxu0 0
      %710 = vmatmul.mubr.bf16.gmra.mxu0 %v624
      %v711 = vpop.f32.mrf.mxu0
      %v712 = vadd.f32 %v550, %v711
      %v713 = vpop.f32.mrf.mxu0
      %v714 = vpop.f32.mrf.mxu0
      %v715 = vadd.f32 %v550, %v714
      %v716 = vpop.f32.mrf.mxu0
      %717 = vmatprep.mubr.bf16.mxu0 0
      %718 = vmatmul.mubr.bf16.gmra.mxu0 %v627
      %v719 = vpop.f32.mrf.mxu0
      %v720 = vadd.f32 %v550, %v719
      %v721 = vpop.f32.mrf.mxu0
      %v722 = vpop.f32.mrf.mxu0
      %v723 = vadd.f32 %v550, %v722
      %v724 = vpop.f32.mrf.mxu0
      %725 = vdwg.mxu0
      %v726 = vmax.f32 %v664, 0.0
      %v727 = vmax.f32 %v667, 0.0
      %v728 = vmax.f32 %v672, 0.0
      %v729 = vmax.f32 %v675, 0.0
      %v730 = vmax.f32 %v680, 0.0
      %v731 = vmax.f32 %v683, 0.0
      %v732 = vmax.f32 %v688, 0.0
      %v733 = vmax.f32 %v691, 0.0
      %v734 = vmax.f32 %v696, 0.0
      %v735 = vmax.f32 %v699, 0.0
      %v736 = vmax.f32 %v704, 0.0
      %v737 = vmax.f32 %v707, 0.0
      %v738 = vmax.f32 %v712, 0.0
      %v739 = vmax.f32 %v715, 0.0
      %v740 = vmax.f32 %v720, 0.0
      %v741 = vmax.f32 %v723, 0.0
      %v742 = vpack.c.bf16 %v727, %v726
      %v743 = vpack.c.bf16 %v729, %v728
      %v744 = vpack.c.bf16 %v731, %v730
      %v745 = vpack.c.bf16 %v733, %v732
      %v746 = vpack.c.bf16 %v735, %v734
      %v747 = vpack.c.bf16 %v737, %v736
      %v748 = vpack.c.bf16 %v739, %v738
      %v749 = vpack.c.bf16 %v741, %v740
      %v750 = vld [vmem:[%s3] sm:$0xf]
      %v751 = vld [vmem:[%s3 + $0x4] sm:$0xf]
      %v752 = vld [vmem:[%s3 + $0x8] sm:$0xf]
      %v753 = vld [vmem:[%s3 + $0xc] sm:$0xf]
      %v754 = vld [vmem:[%s3 + $0x10] sm:$0xf]
      %v755 = vld [vmem:[%s3 + $0x14] sm:$0xf]
      %v756 = vld [vmem:[%s3 + $0x18] sm:$0xf]
      %v757 = vld [vmem:[%s3 + $0x1c] sm:$0xf]
      %v758 = vld [vmem:[%s3 + $0x20] sm:$0xf]
      %v759 = vld [vmem:[%s3 + $0x24] sm:$0xf]
      %v760 = vld [vmem:[%s3 + $0x28] sm:$0xf]
      %v761 = vld [vmem:[%s3 + $0x2c] sm:$0xf]
      %v762 = vld [vmem:[%s3 + $0x30] sm:$0xf]
      %v763 = vld [vmem:[%s3 + $0x34] sm:$0xf]
      %v764 = vld [vmem:[%s3 + $0x38] sm:$0xf]
      %v765 = vld [vmem:[%s3 + $0x3c] sm:$0xf]
      %v766 = vld [vmem:[%s4] sm:$0x1]
      %v768 = vlaneseq
      %v769 = vshrl.u32 %v768, 7
      %v770 = vsub.s32 0, %v769
      %v771 = vrot.slane %v766, %v770
      %v789 = vunpack.c.l.b16 %v750
      %v790 = vunpack.c.l.b16 %v751
      %v791 = vunpack.c.l.b16 %v752
      %v792 = vunpack.c.l.b16 %v753
      %v793 = vunpack.c.l.b16 %v754
      %v794 = vunpack.c.l.b16 %v755
      %v795 = vunpack.c.l.b16 %v756
      %v796 = vunpack.c.l.b16 %v757
      %v797 = vunpack.c.l.b16 %v758
      %v798 = vunpack.c.l.b16 %v759
      %v799 = vunpack.c.l.b16 %v760
      %v800 = vunpack.c.l.b16 %v761
      %v801 = vunpack.c.l.b16 %v762
      %v802 = vunpack.c.l.b16 %v763
      %v803 = vunpack.c.l.b16 %v764
      %v804 = vunpack.c.l.b16 %v765
      %v805 = vpack.c.b16 %v790, %v789
      %v806 = vpack.c.b16 %v792, %v791
      %v807 = vpack.c.b16 %v794, %v793
      %v808 = vpack.c.b16 %v796, %v795
      %v809 = vpack.c.b16 %v798, %v797
      %v810 = vpack.c.b16 %v800, %v799
      %v811 = vpack.c.b16 %v802, %v801
      %v812 = vpack.c.b16 %v804, %v803
      %821 = vmatprep.subr.bf16.mxu0 0
      %822 = vmatpush1.bf16.msra.mxu0 %v812
      %823 = vmatprep.subr.bf16.mxu0 0
      %824 = vmatpush1.bf16.msra.mxu0 %v811
      %825 = vmatprep.subr.bf16.mxu0 0
      %826 = vmatpush1.bf16.msra.mxu0 %v810
      %827 = vmatprep.subr.bf16.mxu0 0
      %828 = vmatpush1.bf16.msra.mxu0 %v809
      %829 = vmatprep.subr.bf16.mxu0 0
      %830 = vmatpush1.bf16.msra.mxu0 %v808
      %831 = vmatprep.subr.bf16.mxu0 0
      %832 = vmatpush1.bf16.msra.mxu0 %v807
      %833 = vmatprep.subr.bf16.mxu0 0
      %834 = vmatpush1.bf16.msra.mxu0 %v806
      %835 = vmatprep.subr.bf16.mxu0 0
      %836 = vmatpush1.bf16.msra.mxu0 %v805
      %837 = vmatprep.subr.bf16.mxu0 0
      %838 = vmatpush2.bf16.msra.mxu0 0
      %839 = vmatprep.subr.bf16.mxu0 0
      %840 = vmatpush2.bf16.msra.mxu0 0
      %841 = vmatprep.subr.bf16.mxu0 0
      %842 = vmatpush2.bf16.msra.mxu0 0
      %843 = vmatprep.subr.bf16.mxu0 0
      %844 = vmatpush2.bf16.msra.mxu0 0
      %845 = vmatprep.subr.bf16.mxu0 0
      %846 = vmatpush2.bf16.msra.mxu0 0
      %847 = vmatprep.subr.bf16.mxu0 0
      %848 = vmatpush2.bf16.msra.mxu0 0
      %849 = vmatprep.subr.bf16.mxu0 0
      %850 = vmatpush2.bf16.msra.mxu0 0
      %851 = vmatprep.subr.bf16.mxu0 0
      %852 = vmatpush2.bf16.msra.mxu0 0
      %853 = vmatprep.mubr.bf16.mxu0 0
      %854 = vmatmul.mubr.bf16.gmra.mxu0 %v742
      %v855 = vpop.f32.mrf.mxu0
      %v856 = vadd.f32 %v771, %v855
      %v857 = vpop.f32.mrf.mxu0
      %v858 = vpop.f32.mrf.mxu0
      %v859 = vadd.f32 %v771, %v858
      %v860 = vpop.f32.mrf.mxu0
      %861 = vmatprep.mubr.bf16.mxu0 0
      %862 = vmatmul.mubr.bf16.gmra.mxu0 %v743
      %v863 = vpop.f32.mrf.mxu0
      %v864 = vadd.f32 %v771, %v863
      %v865 = vpop.f32.mrf.mxu0
      %v866 = vpop.f32.mrf.mxu0
      %v867 = vadd.f32 %v771, %v866
      %v868 = vpop.f32.mrf.mxu0
      %869 = vmatprep.mubr.bf16.mxu0 0
      %870 = vmatmul.mubr.bf16.gmra.mxu0 %v744
      %v871 = vpop.f32.mrf.mxu0
      %v872 = vadd.f32 %v771, %v871
      %v873 = vpop.f32.mrf.mxu0
      %v874 = vpop.f32.mrf.mxu0
      %v875 = vadd.f32 %v771, %v874
      %v876 = vpop.f32.mrf.mxu0
      %877 = vmatprep.mubr.bf16.mxu0 0
      %878 = vmatmul.mubr.bf16.gmra.mxu0 %v745
      %v879 = vpop.f32.mrf.mxu0
      %v880 = vadd.f32 %v771, %v879
      %v881 = vpop.f32.mrf.mxu0
      %v882 = vpop.f32.mrf.mxu0
      %v883 = vadd.f32 %v771, %v882
      %v884 = vpop.f32.mrf.mxu0
      %885 = vmatprep.mubr.bf16.mxu0 0
      %886 = vmatmul.mubr.bf16.gmra.mxu0 %v746
      %v887 = vpop.f32.mrf.mxu0
      %v888 = vadd.f32 %v771, %v887
      %v889 = vpop.f32.mrf.mxu0
      %v890 = vpop.f32.mrf.mxu0
      %v891 = vadd.f32 %v771, %v890
      %v892 = vpop.f32.mrf.mxu0
      %893 = vmatprep.mubr.bf16.mxu0 0
      %894 = vmatmul.mubr.bf16.gmra.mxu0 %v747
      %v895 = vpop.f32.mrf.mxu0
      %v896 = vadd.f32 %v771, %v895
      %v897 = vpop.f32.mrf.mxu0
      %v898 = vpop.f32.mrf.mxu0
      %v899 = vadd.f32 %v771, %v898
      %v900 = vpop.f32.mrf.mxu0
      %901 = vmatprep.mubr.bf16.mxu0 0
      %902 = vmatmul.mubr.bf16.gmra.mxu0 %v748
      %v903 = vpop.f32.mrf.mxu0
      %v904 = vadd.f32 %v771, %v903
      %v905 = vpop.f32.mrf.mxu0
      %v906 = vpop.f32.mrf.mxu0
      %v907 = vadd.f32 %v771, %v906
      %v908 = vpop.f32.mrf.mxu0
      %909 = vmatprep.mubr.bf16.mxu0 0
      %910 = vmatmul.mubr.bf16.gmra.mxu0 %v749
      %v911 = vpop.f32.mrf.mxu0
      %v912 = vadd.f32 %v771, %v911
      %v913 = vpop.f32.mrf.mxu0
      %v914 = vpop.f32.mrf.mxu0
      %v915 = vadd.f32 %v771, %v914
      %v916 = vpop.f32.mrf.mxu0
      %917 = vdwg.mxu0
      %v918 = vmax.f32 %v856, 0.0
      %v919 = vmax.f32 %v859, 0.0
      %v920 = vmax.f32 %v864, 0.0
      %v921 = vmax.f32 %v867, 0.0
      %v922 = vmax.f32 %v872, 0.0
      %v923 = vmax.f32 %v875, 0.0
      %v924 = vmax.f32 %v880, 0.0
      %v925 = vmax.f32 %v883, 0.0
      %v926 = vmax.f32 %v888, 0.0
      %v927 = vmax.f32 %v891, 0.0
      %v928 = vmax.f32 %v896, 0.0
      %v929 = vmax.f32 %v899, 0.0
      %v930 = vmax.f32 %v904, 0.0
      %v931 = vmax.f32 %v907, 0.0
      %v932 = vmax.f32 %v912, 0.0
      %v933 = vmax.f32 %v915, 0.0
      %v934 = vld [vmem:[%s9] sm:$0xf]
      %v935 = vpack.c.bf16 %v919, %v918
      %v936 = vpack.c.bf16 %v921, %v920
      %v937 = vpack.c.bf16 %v923, %v922
      %v938 = vpack.c.bf16 %v925, %v924
      %v939 = vpack.c.bf16 %v927, %v926
      %v940 = vpack.c.bf16 %v929, %v928
      %v941 = vpack.c.bf16 %v931, %v930
      %v942 = vpack.c.bf16 %v933, %v932
      %v943 = vld [vmem:[%s10] sm:$0xff]
      %945 = vset.pattern.permute.xlu0 0
      %946 = vperm.xlu0 %945, %v943
      %v947 = vpop.permute.xlu0 %946
      %949 = vmatprep.subr.bf16.mxu0 0
      %950 = vmatpush1.bf16.xpose.msra.mxu0 %v942
      %951 = vmatprep.subr.bf16.mxu0 0
      %952 = vmatpush1.bf16.xpose.msra.mxu0 %v941
      %953 = vmatprep.subr.bf16.mxu0 0
      %954 = vmatpush1.bf16.xpose.msra.mxu0 %v940
      %955 = vmatprep.subr.bf16.mxu0 0
      %956 = vmatpush1.bf16.xpose.msra.mxu0 %v939
      %957 = vmatprep.subr.bf16.mxu0 0
      %958 = vmatpush1.bf16.xpose.msra.mxu0 %v938
      %959 = vmatprep.subr.bf16.mxu0 0
      %960 = vmatpush1.bf16.xpose.msra.mxu0 %v937
      %961 = vmatprep.subr.bf16.mxu0 0
      %962 = vmatpush1.bf16.xpose.msra.mxu0 %v936
      %963 = vmatprep.subr.bf16.mxu0 0
      %964 = vmatpush1.bf16.xpose.msra.mxu0 %v935
      %965 = vmatprep.subr.bf16.mxu0 0
      %966 = vmatpush2.bf16.xpose.msra.mxu0 0
      %967 = vmatprep.subr.bf16.mxu0 0
      %968 = vmatpush2.bf16.xpose.msra.mxu0 0
      %969 = vmatprep.subr.bf16.mxu0 0
      %970 = vmatpush2.bf16.xpose.msra.mxu0 0
      %971 = vmatprep.subr.bf16.mxu0 0
      %972 = vmatpush2.bf16.xpose.msra.mxu0 0
      %973 = vmatprep.subr.bf16.mxu0 0
      %974 = vmatpush2.bf16.xpose.msra.mxu0 0
      %975 = vmatprep.subr.bf16.mxu0 0
      %976 = vmatpush2.bf16.xpose.msra.mxu0 0
      %977 = vmatprep.subr.bf16.mxu0 0
      %978 = vmatpush2.bf16.xpose.msra.mxu0 0
      %979 = vmatprep.subr.bf16.mxu0 0
      %980 = vmatpush2.bf16.xpose.msra.mxu0 0
      %981 = vmatprep.mubr.bf16.mxu0 0
      %982 = vmatmul.mubr.bf16.gmra.mxu0 %v934
      %v983 = vpop.f32.mrf.mxu0
      %v984 = vadd.f32 %v947, %v983
      %v985 = vpop.f32.mrf.mxu0
      %v986 = vpop.f32.mrf.mxu0
      %v987 = vpop.f32.mrf.mxu0
      %988 = vdwg.mxu0
      %989 = vst [vmem:[%s487] sm:$0xff] %v984
      %v990 = vld [vmem:[#allocation2] sm:$0xff]
      %v991 = vld [vmem:[#allocation2 + $0x8] sm:$0xff]
      %v992 = vld [vmem:[#allocation2 + $0x10] sm:$0xff]
      %v993 = vld [vmem:[#allocation2 + $0x18] sm:$0xff]
      %v994 = vld [vmem:[#allocation2 + $0x20] sm:$0xff]
      %v995 = vld [vmem:[#allocation2 + $0x28] sm:$0xff]
      %v996 = vld [vmem:[#allocation2 + $0x30] sm:$0xff]
      %v997 = vld [vmem:[#allocation2 + $0x38] sm:$0xff]
      %v998 = vld [vmem:[#allocation2 + $0x40] sm:$0xff]
      %v999 = vld [vmem:[#allocation2 + $0x48] sm:$0xff]
      %v1000 = vld [vmem:[#allocation2 + $0x50] sm:$0xff]
      %v1001 = vld [vmem:[#allocation2 + $0x58] sm:$0xff]
      %v1002 = vld [vmem:[#allocation2 + $0x60] sm:$0xff]
      %v1003 = vld [vmem:[#allocation2 + $0x68] sm:$0xff]
      %v1004 = vld [vmem:[#allocation2 + $0x70] sm:$0xff]
      %v1005 = vld [vmem:[#allocation2 + $0x78] sm:$0xff]
      %v1006 = vld [vmem:[#allocation2 + $0x80] sm:$0xff]
      %v1007 = vld [vmem:[#allocation2 + $0x88] sm:$0xff]
      %v1008 = vld [vmem:[#allocation2 + $0x90] sm:$0xff]
      %v1009 = vld [vmem:[#allocation2 + $0x98] sm:$0xff]
      %v1010 = vld [vmem:[#allocation2 + $0xa0] sm:$0xff]
      %v1011 = vld [vmem:[#allocation2 + $0xa8] sm:$0xff]
      %v1012 = vld [vmem:[#allocation2 + $0xb0] sm:$0xff]
      %v1013 = vld [vmem:[#allocation2 + $0xb8] sm:$0xff]
      %v1014 = vld [vmem:[#allocation2 + $0xc0] sm:$0xff]
      %v1015 = vld [vmem:[#allocation2 + $0xc8] sm:$0xff]
      %v1016 = vld [vmem:[#allocation2 + $0xd0] sm:$0xff]
      %v1017 = vld [vmem:[#allocation2 + $0xd8] sm:$0xff]
      %v1018 = vld [vmem:[#allocation2 + $0xe0] sm:$0xff]
      %v1019 = vld [vmem:[#allocation2 + $0xe8] sm:$0xff]
      %v1020 = vld [vmem:[#allocation2 + $0xf0] sm:$0xff]
      %v1021 = vld [vmem:[#allocation2 + $0xf8] sm:$0xff]
      %v1022 = vld [vmem:[%s473] sm:$0xff]
      %v1023 = vld [vmem:[%s473 + $0x8] sm:$0xff]
      %v1024 = vld [vmem:[%s473 + $0x10] sm:$0xff]
      %v1025 = vld [vmem:[%s473 + $0x18] sm:$0xff]
      %v1026 = vld [vmem:[%s473 + $0x20] sm:$0xff]
      %v1027 = vld [vmem:[%s473 + $0x28] sm:$0xff]
      %v1028 = vld [vmem:[%s473 + $0x30] sm:$0xff]
      %v1029 = vld [vmem:[%s473 + $0x38] sm:$0xff]
      %v1030 = vld [vmem:[%s473 + $0x40] sm:$0xff]
      %v1031 = vld [vmem:[%s473 + $0x48] sm:$0xff]
      %v1032 = vld [vmem:[%s473 + $0x50] sm:$0xff]
      %v1033 = vld [vmem:[%s473 + $0x58] sm:$0xff]
      %v1034 = vld [vmem:[%s473 + $0x60] sm:$0xff]
      %v1035 = vld [vmem:[%s473 + $0x68] sm:$0xff]
      %v1036 = vld [vmem:[%s473 + $0x70] sm:$0xff]
      %v1037 = vld [vmem:[%s473 + $0x78] sm:$0xff]
      %1038 = vxpose.xlu0.c.b16.start [1/8] %v742, 128
      %1039 = vxpose.xlu0.c.b16.cont [2/8] %v743, 128
      %1040 = vxpose.xlu0.c.b16.cont [3/8] %v744, 128
      %1041 = vxpose.xlu0.c.b16.cont [4/8] %v745, 128
      %1042 = vxpose.xlu0.c.b16.cont [5/8] %v746, 128
      %1043 = vxpose.xlu0.c.b16.cont [6/8] %v747, 128
      %1044 = vxpose.xlu0.c.b16.cont [7/8] %v748, 128
      %1045 = vxpose.xlu0.c.b16.end [8/8] %v749, 128
      %v1046 = vpop.trf.xlu0
      %v1047 = vpop.trf.xlu0
      %v1048 = vpop.trf.xlu0
      %v1049 = vpop.trf.xlu0
      %v1050 = vpop.trf.xlu0
      %v1051 = vpop.trf.xlu0
      %v1052 = vpop.trf.xlu0
      %v1053 = vpop.trf.xlu0
      %v1070 = vunpack.c.l.b16 %v1022
      %v1071 = vunpack.c.h.b16 %v1022
      %v1072 = vunpack.c.l.b16 %v1023
      %v1073 = vunpack.c.h.b16 %v1023
      %v1074 = vunpack.c.l.b16 %v1024
      %v1075 = vunpack.c.h.b16 %v1024
      %v1076 = vunpack.c.l.b16 %v1025
      %v1077 = vunpack.c.h.b16 %v1025
      %v1078 = vunpack.c.l.b16 %v1026
      %v1079 = vunpack.c.h.b16 %v1026
      %v1080 = vunpack.c.l.b16 %v1027
      %v1081 = vunpack.c.h.b16 %v1027
      %v1082 = vunpack.c.l.b16 %v1028
      %v1083 = vunpack.c.h.b16 %v1028
      %v1084 = vunpack.c.l.b16 %v1029
      %v1085 = vunpack.c.h.b16 %v1029
      %v1086 = vunpack.c.l.b16 %v1030
      %v1087 = vunpack.c.h.b16 %v1030
      %v1088 = vunpack.c.l.b16 %v1031
      %v1089 = vunpack.c.h.b16 %v1031
      %v1090 = vunpack.c.l.b16 %v1032
      %v1091 = vunpack.c.h.b16 %v1032
      %v1092 = vunpack.c.l.b16 %v1033
      %v1093 = vunpack.c.h.b16 %v1033
      %v1094 = vunpack.c.l.b16 %v1034
      %v1095 = vunpack.c.h.b16 %v1034
      %v1096 = vunpack.c.l.b16 %v1035
      %v1097 = vunpack.c.h.b16 %v1035
      %v1098 = vunpack.c.l.b16 %v1036
      %v1099 = vunpack.c.h.b16 %v1036
      %v1100 = vunpack.c.l.b16 %v1037
      %v1101 = vunpack.c.h.b16 %v1037
      %v1102 = vpack.c.b16 %v1072, %v1070
      %v1103 = vpack.c.b16 %v1073, %v1071
      %v1104 = vpack.c.b16 %v1076, %v1074
      %v1105 = vpack.c.b16 %v1077, %v1075
      %v1106 = vpack.c.b16 %v1080, %v1078
      %v1107 = vpack.c.b16 %v1081, %v1079
      %v1108 = vpack.c.b16 %v1084, %v1082
      %v1109 = vpack.c.b16 %v1085, %v1083
      %v1110 = vpack.c.b16 %v1088, %v1086
      %v1111 = vpack.c.b16 %v1089, %v1087
      %v1112 = vpack.c.b16 %v1092, %v1090
      %v1113 = vpack.c.b16 %v1093, %v1091
      %v1114 = vpack.c.b16 %v1096, %v1094
      %v1115 = vpack.c.b16 %v1097, %v1095
      %v1116 = vpack.c.b16 %v1100, %v1098
      %v1117 = vpack.c.b16 %v1101, %v1099
      %1134 = vmatprep.subr.bf16.mxu0 %v1117
      %1135 = vmatpush1.bf16.msra.mxu0 %v1116
      %1136 = vmatprep.subr.bf16.mxu0 %v1115
      %1137 = vmatpush1.bf16.msra.mxu0 %v1114
      %1138 = vmatprep.subr.bf16.mxu0 %v1113
      %1139 = vmatpush1.bf16.msra.mxu0 %v1112
      %1140 = vmatprep.subr.bf16.mxu0 %v1111
      %1141 = vmatpush1.bf16.msra.mxu0 %v1110
      %1142 = vmatprep.subr.bf16.mxu0 %v1109
      %1143 = vmatpush1.bf16.msra.mxu0 %v1108
      %1144 = vmatprep.subr.bf16.mxu0 %v1107
      %1145 = vmatpush1.bf16.msra.mxu0 %v1106
      %1146 = vmatprep.subr.bf16.mxu0 %v1105
      %1147 = vmatpush1.bf16.msra.mxu0 %v1104
      %1148 = vmatprep.subr.bf16.mxu0 %v1103
      %1149 = vmatpush1.bf16.msra.mxu0 %v1102
      %1150 = vmatprep.subr.bf16.mxu0 0
      %1151 = vmatpush2.bf16.msra.mxu0 0
      %1152 = vmatprep.subr.bf16.mxu0 0
      %1153 = vmatpush2.bf16.msra.mxu0 0
      %1154 = vmatprep.subr.bf16.mxu0 0
      %1155 = vmatpush2.bf16.msra.mxu0 0
      %1156 = vmatprep.subr.bf16.mxu0 0
      %1157 = vmatpush2.bf16.msra.mxu0 0
      %1158 = vmatprep.subr.bf16.mxu0 0
      %1159 = vmatpush2.bf16.msra.mxu0 0
      %1160 = vmatprep.subr.bf16.mxu0 0
      %1161 = vmatpush2.bf16.msra.mxu0 0
      %1162 = vmatprep.subr.bf16.mxu0 0
      %1163 = vmatpush2.bf16.msra.mxu0 0
      %1164 = vmatprep.subr.bf16.mxu0 0
      %1165 = vmatpush2.bf16.msra.mxu0 0
      %1166 = vmatprep.mubr.bf16.mxu0 0
      %1167 = vmatmul.mubr.bf16.gmra.mxu0 %v1046
      %v1168 = vpop.f32.mrf.mxu0
      %v1169 = vadd.f32 0.0, %v1168
      %v1170 = vpop.f32.mrf.mxu0
      %v1171 = vadd.f32 0.0, %v1170
      %v1172 = vpop.f32.mrf.mxu0
      %v1173 = vadd.f32 0.0, %v1172
      %v1174 = vpop.f32.mrf.mxu0
      %v1175 = vadd.f32 0.0, %v1174
      %1176 = vmatprep.mubr.bf16.mxu0 0
      %1177 = vmatmul.mubr.bf16.gmra.mxu0 %v1047
      %v1178 = vpop.f32.mrf.mxu0
      %v1179 = vadd.f32 0.0, %v1178
      %v1180 = vpop.f32.mrf.mxu0
      %v1181 = vadd.f32 0.0, %v1180
      %v1182 = vpop.f32.mrf.mxu0
      %v1183 = vadd.f32 0.0, %v1182
      %v1184 = vpop.f32.mrf.mxu0
      %v1185 = vadd.f32 0.0, %v1184
      %1186 = vmatprep.mubr.bf16.mxu0 0
      %1187 = vmatmul.mubr.bf16.gmra.mxu0 %v1048
      %v1188 = vpop.f32.mrf.mxu0
      %v1189 = vadd.f32 0.0, %v1188
      %v1190 = vpop.f32.mrf.mxu0
      %v1191 = vadd.f32 0.0, %v1190
      %v1192 = vpop.f32.mrf.mxu0
      %v1193 = vadd.f32 0.0, %v1192
      %v1194 = vpop.f32.mrf.mxu0
      %v1195 = vadd.f32 0.0, %v1194
      %1196 = vmatprep.mubr.bf16.mxu0 0
      %1197 = vmatmul.mubr.bf16.gmra.mxu0 %v1049
      %v1198 = vpop.f32.mrf.mxu0
      %v1199 = vadd.f32 0.0, %v1198
      %v1200 = vpop.f32.mrf.mxu0
      %v1201 = vadd.f32 0.0, %v1200
      %v1202 = vpop.f32.mrf.mxu0
      %v1203 = vadd.f32 0.0, %v1202
      %v1204 = vpop.f32.mrf.mxu0
      %v1205 = vadd.f32 0.0, %v1204
      %1206 = vmatprep.mubr.bf16.mxu0 0
      %1207 = vmatmul.mubr.bf16.gmra.mxu0 %v1050
      %v1208 = vpop.f32.mrf.mxu0
      %v1209 = vadd.f32 0.0, %v1208
      %v1210 = vpop.f32.mrf.mxu0
      %v1211 = vadd.f32 0.0, %v1210
      %v1212 = vpop.f32.mrf.mxu0
      %v1213 = vadd.f32 0.0, %v1212
      %v1214 = vpop.f32.mrf.mxu0
      %v1215 = vadd.f32 0.0, %v1214
      %1216 = vmatprep.mubr.bf16.mxu0 0
      %1217 = vmatmul.mubr.bf16.gmra.mxu0 %v1051
      %v1218 = vpop.f32.mrf.mxu0
      %v1219 = vadd.f32 0.0, %v1218
      %v1220 = vpop.f32.mrf.mxu0
      %v1221 = vadd.f32 0.0, %v1220
      %v1222 = vpop.f32.mrf.mxu0
      %v1223 = vadd.f32 0.0, %v1222
      %v1224 = vpop.f32.mrf.mxu0
      %v1225 = vadd.f32 0.0, %v1224
      %1226 = vmatprep.mubr.bf16.mxu0 0
      %1227 = vmatmul.mubr.bf16.gmra.mxu0 %v1052
      %v1228 = vpop.f32.mrf.mxu0
      %v1229 = vadd.f32 0.0, %v1228
      %v1230 = vpop.f32.mrf.mxu0
      %v1231 = vadd.f32 0.0, %v1230
      %v1232 = vpop.f32.mrf.mxu0
      %v1233 = vadd.f32 0.0, %v1232
      %v1234 = vpop.f32.mrf.mxu0
      %v1235 = vadd.f32 0.0, %v1234
      %1236 = vmatprep.mubr.bf16.mxu0 0
      %1237 = vmatmul.mubr.bf16.gmra.mxu0 %v1053
      %v1238 = vpop.f32.mrf.mxu0
      %v1239 = vadd.f32 0.0, %v1238
      %v1240 = vpop.f32.mrf.mxu0
      %v1241 = vadd.f32 0.0, %v1240
      %v1242 = vpop.f32.mrf.mxu0
      %v1243 = vadd.f32 0.0, %v1242
      %v1244 = vpop.f32.mrf.mxu0
      %v1245 = vadd.f32 0.0, %v1244
      %1246 = vdwg.mxu0
      %v1247 = vadd.f32 %v990, %v1169
      %v1248 = vadd.f32 %v991, %v1171
      %v1249 = vadd.f32 %v992, %v1173
      %v1250 = vadd.f32 %v993, %v1175
      %v1251 = vadd.f32 %v994, %v1179
      %v1252 = vadd.f32 %v995, %v1181
      %v1253 = vadd.f32 %v996, %v1183
      %v1254 = vadd.f32 %v997, %v1185
      %v1255 = vadd.f32 %v998, %v1189
      %v1256 = vadd.f32 %v999, %v1191
      %v1257 = vadd.f32 %v1000, %v1193
      %v1258 = vadd.f32 %v1001, %v1195
      %v1259 = vadd.f32 %v1002, %v1199
      %v1260 = vadd.f32 %v1003, %v1201
      %v1261 = vadd.f32 %v1004, %v1203
      %v1262 = vadd.f32 %v1005, %v1205
      %v1263 = vadd.f32 %v1006, %v1209
      %v1264 = vadd.f32 %v1007, %v1211
      %v1265 = vadd.f32 %v1008, %v1213
      %v1266 = vadd.f32 %v1009, %v1215
      %v1267 = vadd.f32 %v1010, %v1219
      %v1268 = vadd.f32 %v1011, %v1221
      %v1269 = vadd.f32 %v1012, %v1223
      %v1270 = vadd.f32 %v1013, %v1225
      %v1271 = vadd.f32 %v1014, %v1229
      %v1272 = vadd.f32 %v1015, %v1231
      %v1273 = vadd.f32 %v1016, %v1233
      %v1274 = vadd.f32 %v1017, %v1235
      %v1275 = vadd.f32 %v1018, %v1239
      %v1276 = vadd.f32 %v1019, %v1241
      %v1277 = vadd.f32 %v1020, %v1243
      %v1278 = vadd.f32 %v1021, %v1245
      %1279 = vst [vmem:[#allocation2] sm:$0xff] %v1247
      %1280 = vst [vmem:[#allocation2 + $0x8] sm:$0xff] %v1248
      %1281 = vst [vmem:[#allocation2 + $0x10] sm:$0xff] %v1249
      %1282 = vst [vmem:[#allocation2 + $0x18] sm:$0xff] %v1250
      %1283 = vst [vmem:[#allocation2 + $0x20] sm:$0xff] %v1251
      %1284 = vst [vmem:[#allocation2 + $0x28] sm:$0xff] %v1252
      %1285 = vst [vmem:[#allocation2 + $0x30] sm:$0xff] %v1253
      %1286 = vst [vmem:[#allocation2 + $0x38] sm:$0xff] %v1254
      %1287 = vst [vmem:[#allocation2 + $0x40] sm:$0xff] %v1255
      %1288 = vst [vmem:[#allocation2 + $0x48] sm:$0xff] %v1256
      %1289 = vst [vmem:[#allocation2 + $0x50] sm:$0xff] %v1257
      %1290 = vst [vmem:[#allocation2 + $0x58] sm:$0xff] %v1258
      %1291 = vst [vmem:[#allocation2 + $0x60] sm:$0xff] %v1259
      %1292 = vst [vmem:[#allocation2 + $0x68] sm:$0xff] %v1260
      %1293 = vst [vmem:[#allocation2 + $0x70] sm:$0xff] %v1261
      %1294 = vst [vmem:[#allocation2 + $0x78] sm:$0xff] %v1262
      %1295 = vst [vmem:[#allocation2 + $0x80] sm:$0xff] %v1263
      %1296 = vst [vmem:[#allocation2 + $0x88] sm:$0xff] %v1264
      %1297 = vst [vmem:[#allocation2 + $0x90] sm:$0xff] %v1265
      %1298 = vst [vmem:[#allocation2 + $0x98] sm:$0xff] %v1266
      %1299 = vst [vmem:[#allocation2 + $0xa0] sm:$0xff] %v1267
      %1300 = vst [vmem:[#allocation2 + $0xa8] sm:$0xff] %v1268
      %1301 = vst [vmem:[#allocation2 + $0xb0] sm:$0xff] %v1269
      %1302 = vst [vmem:[#allocation2 + $0xb8] sm:$0xff] %v1270
      %1303 = vst [vmem:[#allocation2 + $0xc0] sm:$0xff] %v1271
      %1304 = vst [vmem:[#allocation2 + $0xc8] sm:$0xff] %v1272
      %1305 = vst [vmem:[#allocation2 + $0xd0] sm:$0xff] %v1273
      %1306 = vst [vmem:[#allocation2 + $0xd8] sm:$0xff] %v1274
      %1307 = vst [vmem:[#allocation2 + $0xe0] sm:$0xff] %v1275
      %1308 = vst [vmem:[#allocation2 + $0xe8] sm:$0xff] %v1276
      %1309 = vst [vmem:[#allocation2 + $0xf0] sm:$0xff] %v1277
      %1310 = vst [vmem:[#allocation2 + $0xf8] sm:$0xff] %v1278
      %p1311 = scmp.eq.s32.totalorder %s29, 1
      // Predicated region
      $region69: #{bev_lane_traced_forward.1} parent=63 // pred_check
        %p1312 = pneg %p1311
      $region70: #{bev_lane_traced_forward.1} parent=63 // pred_check_branch
        %1314 = sbr.rel (%p1312) target = $region72
      $region71: #{bev_lane_traced_forward.1} parent=63 // pred_region
        %v1315 = vld [vmem:[#allocation2] sm:$0xff]
        %v1316 = vld [vmem:[#allocation2 + $0x8] sm:$0xff]
        %v1317 = vld [vmem:[#allocation2 + $0x10] sm:$0xff]
        %v1318 = vld [vmem:[#allocation2 + $0x18] sm:$0xff]
        %v1319 = vld [vmem:[#allocation2 + $0x20] sm:$0xff]
        %v1320 = vld [vmem:[#allocation2 + $0x28] sm:$0xff]
        %v1321 = vld [vmem:[#allocation2 + $0x30] sm:$0xff]
        %v1322 = vld [vmem:[#allocation2 + $0x38] sm:$0xff]
        %v1323 = vld [vmem:[#allocation2 + $0x40] sm:$0xff]
        %v1324 = vld [vmem:[#allocation2 + $0x48] sm:$0xff]
        %v1325 = vld [vmem:[#allocation2 + $0x50] sm:$0xff]
        %v1326 = vld [vmem:[#allocation2 + $0x58] sm:$0xff]
        %v1327 = vld [vmem:[#allocation2 + $0x60] sm:$0xff]
        %v1328 = vld [vmem:[#allocation2 + $0x68] sm:$0xff]
        %v1329 = vld [vmem:[#allocation2 + $0x70] sm:$0xff]
        %v1330 = vld [vmem:[#allocation2 + $0x78] sm:$0xff]
        %v1331 = vld [vmem:[#allocation2 + $0x80] sm:$0xff]
        %v1332 = vld [vmem:[#allocation2 + $0x88] sm:$0xff]
        %v1333 = vld [vmem:[#allocation2 + $0x90] sm:$0xff]
        %v1334 = vld [vmem:[#allocation2 + $0x98] sm:$0xff]
        %v1335 = vld [vmem:[#allocation2 + $0xa0] sm:$0xff]
        %v1336 = vld [vmem:[#allocation2 + $0xa8] sm:$0xff]
        %v1337 = vld [vmem:[#allocation2 + $0xb0] sm:$0xff]
        %v1338 = vld [vmem:[#allocation2 + $0xb8] sm:$0xff]
        %v1339 = vld [vmem:[#allocation2 + $0xc0] sm:$0xff]
        %v1340 = vld [vmem:[#allocation2 + $0xc8] sm:$0xff]
        %v1341 = vld [vmem:[#allocation2 + $0xd0] sm:$0xff]
        %v1342 = vld [vmem:[#allocation2 + $0xd8] sm:$0xff]
        %v1343 = vld [vmem:[#allocation2 + $0xe0] sm:$0xff]
        %v1344 = vld [vmem:[#allocation2 + $0xe8] sm:$0xff]
        %v1345 = vld [vmem:[#allocation2 + $0xf0] sm:$0xff]
        %v1346 = vld [vmem:[#allocation2 + $0xf8] sm:$0xff]
        %v1347 = vld [vmem:[%s6] sm:$0x3]
        %v1349 = vlaneseq
        %v1350 = vshrl.u32 %v1349, 7
        %v1351 = vsub.s32 0, %v1350
        %v1352 = vrot.slane %v1347, %v1351
        %v1353 = vlaneseq
        %v1354 = vshrl.u32 %v1353, 7
        %v1355 = vsub.s32 1, %v1354
        %v1356 = vrot.slane %v1347, %v1355
        %v1359 = vadd.f32 %v1315, %v1352
        %v1360 = vadd.f32 %v1316, %v1356
        %v1361 = vadd.f32 %v1317, %v1352
        %v1362 = vadd.f32 %v1318, %v1356
        %v1363 = vadd.f32 %v1319, %v1352
        %v1364 = vadd.f32 %v1320, %v1356
        %v1365 = vadd.f32 %v1321, %v1352
        %v1366 = vadd.f32 %v1322, %v1356
        %v1367 = vadd.f32 %v1323, %v1352
        %v1368 = vadd.f32 %v1324, %v1356
        %v1369 = vadd.f32 %v1325, %v1352
        %v1370 = vadd.f32 %v1326, %v1356
        %v1371 = vadd.f32 %v1327, %v1352
        %v1372 = vadd.f32 %v1328, %v1356
        %v1373 = vadd.f32 %v1329, %v1352
        %v1374 = vadd.f32 %v1330, %v1356
        %v1375 = vadd.f32 %v1331, %v1352
        %v1376 = vadd.f32 %v1332, %v1356
        %v1377 = vadd.f32 %v1333, %v1352
        %v1378 = vadd.f32 %v1334, %v1356
        %v1379 = vadd.f32 %v1335, %v1352
        %v1380 = vadd.f32 %v1336, %v1356
        %v1381 = vadd.f32 %v1337, %v1352
        %v1382 = vadd.f32 %v1338, %v1356
        %v1383 = vadd.f32 %v1339, %v1352
        %v1384 = vadd.f32 %v1340, %v1356
        %v1385 = vadd.f32 %v1341, %v1352
        %v1386 = vadd.f32 %v1342, %v1356
        %v1387 = vadd.f32 %v1343, %v1352
        %v1388 = vadd.f32 %v1344, %v1356
        %v1389 = vadd.f32 %v1345, %v1352
        %v1390 = vadd.f32 %v1346, %v1356
        %v1391 = vmax.f32 %v1359, 0.0
        %v1392 = vmax.f32 %v1360, 0.0
        %v1393 = vmax.f32 %v1361, 0.0
        %v1394 = vmax.f32 %v1362, 0.0
        %v1395 = vmax.f32 %v1363, 0.0
        %v1396 = vmax.f32 %v1364, 0.0
        %v1397 = vmax.f32 %v1365, 0.0
        %v1398 = vmax.f32 %v1366, 0.0
        %v1399 = vmax.f32 %v1367, 0.0
        %v1400 = vmax.f32 %v1368, 0.0
        %v1401 = vmax.f32 %v1369, 0.0
        %v1402 = vmax.f32 %v1370, 0.0
        %v1403 = vmax.f32 %v1371, 0.0
        %v1404 = vmax.f32 %v1372, 0.0
        %v1405 = vmax.f32 %v1373, 0.0
        %v1406 = vmax.f32 %v1374, 0.0
        %v1407 = vmax.f32 %v1375, 0.0
        %v1408 = vmax.f32 %v1376, 0.0
        %v1409 = vmax.f32 %v1377, 0.0
        %v1410 = vmax.f32 %v1378, 0.0
        %v1411 = vmax.f32 %v1379, 0.0
        %v1412 = vmax.f32 %v1380, 0.0
        %v1413 = vmax.f32 %v1381, 0.0
        %v1414 = vmax.f32 %v1382, 0.0
        %v1415 = vmax.f32 %v1383, 0.0
        %v1416 = vmax.f32 %v1384, 0.0
        %v1417 = vmax.f32 %v1385, 0.0
        %v1418 = vmax.f32 %v1386, 0.0
        %v1419 = vmax.f32 %v1387, 0.0
        %v1420 = vmax.f32 %v1388, 0.0
        %v1421 = vmax.f32 %v1389, 0.0
        %v1422 = vmax.f32 %v1390, 0.0
        %v1423 = vld [vmem:[%s7] sm:$0xf]
        %v1424 = vpack.c.bf16 %v1393, %v1391
        %v1425 = vpack.c.bf16 %v1394, %v1392
        %v1426 = vpack.c.bf16 %v1397, %v1395
        %v1427 = vpack.c.bf16 %v1398, %v1396
        %v1428 = vpack.c.bf16 %v1401, %v1399
        %v1429 = vpack.c.bf16 %v1402, %v1400
        %v1430 = vpack.c.bf16 %v1405, %v1403
        %v1431 = vpack.c.bf16 %v1406, %v1404
        %v1432 = vpack.c.bf16 %v1409, %v1407
        %v1433 = vpack.c.bf16 %v1410, %v1408
        %v1434 = vpack.c.bf16 %v1413, %v1411
        %v1435 = vpack.c.bf16 %v1414, %v1412
        %v1436 = vpack.c.bf16 %v1417, %v1415
        %v1437 = vpack.c.bf16 %v1418, %v1416
        %v1438 = vpack.c.bf16 %v1421, %v1419
        %v1439 = vpack.c.bf16 %v1422, %v1420
        %v1440 = vld [vmem:[%s8] sm:$0xff]
        %1442 = vset.pattern.permute.xlu0 0
        %1443 = vperm.xlu0 %1442, %v1440
        %v1444 = vpop.permute.xlu0 %1443
        %1446 = vmatprep.subr.bf16.mxu0 %v1439
        %1447 = vmatpush1.bf16.msra.mxu0 %v1438
        %1448 = vmatprep.subr.bf16.mxu0 %v1437
        %1449 = vmatpush1.bf16.msra.mxu0 %v1436
        %1450 = vmatprep.subr.bf16.mxu0 %v1435
        %1451 = vmatpush1.bf16.msra.mxu0 %v1434
        %1452 = vmatprep.subr.bf16.mxu0 %v1433
        %1453 = vmatpush1.bf16.msra.mxu0 %v1432
        %1454 = vmatprep.subr.bf16.mxu0 %v1431
        %1455 = vmatpush1.bf16.msra.mxu0 %v1430
        %1456 = vmatprep.subr.bf16.mxu0 %v1429
        %1457 = vmatpush1.bf16.msra.mxu0 %v1428
        %1458 = vmatprep.subr.bf16.mxu0 %v1427
        %1459 = vmatpush1.bf16.msra.mxu0 %v1426
        %1460 = vmatprep.subr.bf16.mxu0 %v1425
        %1461 = vmatpush1.bf16.msra.mxu0 %v1424
        %1462 = vmatprep.subr.bf16.mxu0 0
        %1463 = vmatpush2.bf16.msra.mxu0 0
        %1464 = vmatprep.subr.bf16.mxu0 0
        %1465 = vmatpush2.bf16.msra.mxu0 0
        %1466 = vmatprep.subr.bf16.mxu0 0
        %1467 = vmatpush2.bf16.msra.mxu0 0
        %1468 = vmatprep.subr.bf16.mxu0 0
        %1469 = vmatpush2.bf16.msra.mxu0 0
        %1470 = vmatprep.subr.bf16.mxu0 0
        %1471 = vmatpush2.bf16.msra.mxu0 0
        %1472 = vmatprep.subr.bf16.mxu0 0
        %1473 = vmatpush2.bf16.msra.mxu0 0
        %1474 = vmatprep.subr.bf16.mxu0 0
        %1475 = vmatpush2.bf16.msra.mxu0 0
        %1476 = vmatprep.subr.bf16.mxu0 0
        %1477 = vmatpush2.bf16.msra.mxu0 0
        %1478 = vmatprep.mubr.bf16.mxu0 0
        %1479 = vmatmul.mubr.bf16.gmra.mxu0 %v1423
        %v1480 = vpop.f32.mrf.mxu0
        %v1481 = vadd.f32 %v1444, %v1480
        %v1482 = vpop.f32.mrf.mxu0
        %v1483 = vadd.f32 %v1444, %v1482
        %v1484 = vpop.f32.mrf.mxu0
        %v1485 = vpop.f32.mrf.mxu0
        %1486 = vdwg.mxu0
        %1487 = vst [vmem:[%s479] sm:$0xff] %v1481
        %1488 = vst [vmem:[%s479 + $0x8] sm:$0xff] %v1483
      $region72: #{bev_lane_traced_forward.1} parent=63 // pred_fallthru
        _
      %p1489 = scmp.lt.s32.totalorder %s28, 1
      %s1490 = scalar_select %p1489, %s28, 1
      %s1491 = smul.addr %s1490, 2
      %s1492 = smul.addr %s1491, 8
      %s1493 = scalar_lea.vmem %s11, %s1492
      %p1494 = scmp.lt.s32.totalorder %s28, 1
      %s1495 = scalar_select %p1494, %s28, 1
      %p1496 = scmp.lt.s32.totalorder %s29, 1
      %s1497 = scalar_select %p1496, %s29, 1
      %s1498 = smul.addr %s1495, 2
      %s1499 = sadd.s32 %s1497, %s1498
      %s1500 = smul.addr %s1499, 8
      %s1501 = scalar_lea.vmem %s12, %s1500
      // Predicated region
      $region73: #{bev_lane_traced_forward.1} parent=63 // pred_check
        %p1502 = pneg %p299
      $region74: #{bev_lane_traced_forward.1} parent=63 // pred_check_branch
        %1504 = sbr.rel (%p1502) target = $region76
      $region75: #{bev_lane_traced_forward.1} parent=63 // pred_region
        _
      $region76: #{bev_lane_traced_forward.1} parent=63 // pred_fallthru
        _
      // Predicated region
      $region77: #{bev_lane_traced_forward.1} parent=63 // pred_check
        %p1505 = pneg %p327
      $region78: #{bev_lane_traced_forward.1} parent=63 // pred_check_branch
        %1507 = sbr.rel (%p1505) target = $region80
      $region79: #{bev_lane_traced_forward.1} parent=63 // pred_region
        _
      $region80: #{bev_lane_traced_forward.1} parent=63 // pred_fallthru
        _
    $region64: #{bev_lane_traced_forward.1} parent=5 // pred_fallthru
      _
    %p1508 = scmp.le.s32.totalorder 2, %s19
    // Predicated region
    $region81: #{bev_lane_traced_forward.1} parent=5 // pred_check
      %p1509 = pneg %p1508
    $region82: #{bev_lane_traced_forward.1} parent=5 // pred_check_branch
      %1511 = sbr.rel (%p1509) target = $region84
    $region83: #{bev_lane_traced_forward.1} parent=5 // pred_region
      %s1512 = ssub.s32 %s19, 2
      // Predicated region
      $region85: #{bev_lane_traced_forward.1} parent=83 // pred_check
        %p1513 = pneg %p305
      $region86: #{bev_lane_traced_forward.1} parent=83 // pred_check_branch
        %1515 = sbr.rel (%p1513) target = $region88
      $region87: #{bev_lane_traced_forward.1} parent=83 // pred_region
        %p1516 = scmp.lt.s32.totalorder %s30, 1
        %s1517 = scalar_select %p1516, %s30, 1
        %s1518 = smul.addr %s1517, 2
        %s1519 = smul.addr %s1518, 8
        %s1520 = scalar_lea.vmem %s11, %s1519
      $region88: #{bev_lane_traced_forward.1} parent=83 // pred_fallthru
        _
      // Predicated region
      $region89: #{bev_lane_traced_forward.1} parent=83 // pred_check
        %p1521 = pneg %p333
      $region90: #{bev_lane_traced_forward.1} parent=83 // pred_check_branch
        %1523 = sbr.rel (%p1521) target = $region92
      $region91: #{bev_lane_traced_forward.1} parent=83 // pred_region
        %p1524 = scmp.lt.s32.totalorder %s30, 1
        %s1525 = scalar_select %p1524, %s30, 1
        %p1526 = scmp.lt.s32.totalorder %s31, 1
        %s1527 = scalar_select %p1526, %s31, 1
        %s1528 = smul.addr %s1525, 2
        %s1529 = sadd.s32 %s1527, %s1528
        %s1530 = smul.addr %s1529, 8
        %s1531 = scalar_lea.vmem %s12, %s1530
      $region92: #{bev_lane_traced_forward.1} parent=83 // pred_fallthru
        _
    $region84: #{bev_lane_traced_forward.1} parent=5 // pred_fallthru
      _
  $region6: #{bev_lane_traced_forward.1} parent=0 // loop_footer
    %s23 = sadd.s32 1, %s19
  $region7: #{bev_lane_traced_forward.1} parent=0 // loop_footer_branch
    %18 = sbr.rel target = $region3
  $region8: #{bev_lane_traced_forward.1} parent=0 // loop_exit
    _

</llo_original>
